<compile_context>
chip_gen: v5e
topology: v5e:2x2
jax: 0.10.0
libtpu: 0.0.40
codegen_flags: <defaults>
</compile_context>

<pallas_src>
import functools
import numpy as np
import jax
import jax.numpy as jnp
from jax import lax
from jax.experimental import pallas as pl
from jax.experimental.pallas import tpu as pltpu

EPS = 1e-5


def _relu6(x):
    return jnp.clip(x, 0.0, 6.0)


# ----------------------------------------------------------------------------
# Pallas kernel: one batch tile per grid step, layout (batch*channels, HW).
# ----------------------------------------------------------------------------
def _lmca_kernel(x_ref, p2t_ref, w12_ref, b12_ref, ut_ref, wm_ref, bm_ref,
                 we_ref, be_ref, wf_ref, bf_ref, mask_ref, o_ref, *, width):
    f32, bf16 = jnp.float32, jnp.bfloat16
    hw = x_ref.shape[1]
    mid_bt = wm_ref.shape[0]        # batch_tile * MID
    out_bt = wf_ref.shape[0]        # batch_tile * OUT

    # Input arrives in f32 (no wrapper-side convert pass); cast to bf16 just
    # before feeding the MXU.
    x = x_ref[...].astype(bf16)                                        # (bt*C, HW)

    # adaptive_avg_pool2d (H,W)->(p,p) as a row-wise spatial operator matmul.
    xp = jnp.dot(x, p2t_ref[...], preferred_element_type=f32)          # (bt*C, PP)

    # pool1_conv & pool2_conv (1x1 conv + folded BN + ReLU6): one matmul,
    # block-diagonal over the batch tile (rows [0:bt*MID]=pool1, rest=pool2).
    pool12 = _relu6(jnp.dot(w12_ref[...], xp.astype(bf16),
                            preferred_element_type=f32) + b12_ref[...])  # (2*bt*MID, PP)
    pooled = pool12[:mid_bt, :] * pool12[mid_bt:, :]                    # (bt*MID, PP)

    # bilinear upsample (p,p)->(H,W), align_corners=False, row-wise matmul.
    up = jnp.dot(pooled.astype(bf16), ut_ref[...],
                 preferred_element_type=f32)                            # (bt*MID, HW)

    # conv_main : 1x1 conv + folded BN + ReLU6 (block-diag over batch tile).
    main = _relu6(jnp.dot(wm_ref[...], up.astype(bf16),
                          preferred_element_type=f32) + bm_ref[...])    # (bt*MID, HW)

    # conv_expand1 / conv_expand2 (3x3, block-diagonal over the two channel
    # halves and over the batch tile): one stacked channel-mixing matmul for
    # all 9 taps, then per-tap static lane roll + border mask (XLU/VPU only).
    proj = jnp.dot(we_ref[...], main.astype(bf16),
                   preferred_element_type=f32)                          # (9*bt*OUT, HW)

    def shifted_tap(t):
        dh, dw = t // 3 - 1, t % 3 - 1
        d = dh * width + dw                                             # flat spatial offset
        v = proj[t * out_bt:(t + 1) * out_bt, :]                        # aligned sublane slice
        if d != 0:
            v = pltpu.roll(v, (-d) % hw, 1)                             # XLU lane rotate
        return v * mask_ref[t]                                          # zero padded border

    # centre tap (t=4): zero shift and an all-ones mask -> use it directly as
    # the accumulator init (saves a zeros materialisation + add + mask mul).
    acc = proj[4 * out_bt:5 * out_bt, :]
    for t in (0, 1, 2, 3, 5, 6, 7, 8):                                  # static unroll
        acc = acc + shifted_tap(t)
    expand = _relu6(acc + be_ref[...])                                  # (bt*OUT, HW)

    # final_fusion : 1x1 conv + folded BN (no activation); emit bf16.
    o_ref[...] = (jnp.dot(wf_ref[...], expand.astype(bf16),
                          preferred_element_type=f32)
                  + bf_ref[...]).astype(o_ref.dtype)


# ----------------------------------------------------------------------------
# Shape-derived operator matrices / masks (deterministic, built in glue).
# ----------------------------------------------------------------------------
def adaptive_pool_matrix(in_size, out_size):
    m = np.zeros((out_size, in_size), np.float32)
    for i in range(out_size):
        s = (i * in_size) // out_size
        e = -((-(i + 1) * in_size) // out_size)   # ceil
        m[i, s:e] = 1.0 / (e - s)
    return m


def bilinear_matrix(in_size, out_size):
    # PyTorch F.interpolate(mode='bilinear', align_corners=False) semantics.
    # Only the upsampling case is exercised/supported (low-end clamp only).
    assert out_size >= in_size, "bilinear_matrix only validated for upsampling"
    m = np.zeros((out_size, in_size), np.float32)
    scale = in_size / out_size
    for o in range(out_size):
        src = (o + 0.5) * scale - 0.5
        if src < 0.0:
            src = 0.0
        i0 = min(int(np.floor(src)), in_size - 1)
        i1 = min(i0 + 1, in_size - 1)
        frac = src - i0
        m[o, i0] += 1.0 - frac
        m[o, i1] += frac
    return m


def tap_masks(H, W):
    # masks[t, 0, h*W+w] == 1 iff the 3x3 tap t has a valid (in-bounds) source.
    masks = np.zeros((9, 1, H * W), np.float32)
    for dh in range(3):
        for dw in range(3):
            t = dh * 3 + dw
            hs, ws = dh - 1, dw - 1
            valid = np.zeros((H, W), np.float32)
            valid[max(0, -hs):min(H, H - hs), max(0, -ws):min(W, W - ws)] = 1.0
            masks[t, 0] = valid.reshape(-1)
    return masks


# ----------------------------------------------------------------------------
# Deterministic parameter construction (conv weights + BN folded).
# ----------------------------------------------------------------------------
def build_module_params(key, in_c, out_c):
    mid, midh, outh = in_c // 2, (in_c // 2) // 2, out_c // 2
    ks = jax.random.split(key, 12)

    def conv_w(k, cout, cin, ksz):
        return jax.random.normal(k, (cout, cin, ksz, ksz), jnp.float32) / np.sqrt(cin * ksz * ksz)

    def conv_b(k, cout):
        return 0.05 * jax.random.normal(k, (cout,), jnp.float32)

    def bn(cout, off):
        i = jnp.arange(cout, dtype=jnp.float32)
        gamma = 1.0 + 0.1 * jnp.cos(0.7 * i + off)
        beta = 0.05 * jnp.sin(1.1 * i + off)
        mean = 0.03 * jnp.sin(0.9 * i + off)
        var = 1.0 + 0.2 * (0.5 + 0.5 * jnp.cos(1.3 * i + off))
        return gamma, beta, mean, var

    def fold(w, b, bn_p):
        gamma, beta, mean, var = bn_p
        scale = gamma / jnp.sqrt(var + EPS)
        return w * scale[:, None, None, None], (b - mean) * scale + beta

    w_p1, b_p1 = fold(conv_w(ks[0], mid, in_c, 1), conv_b(ks[1], mid), bn(mid, 0.1))
    w_p2, b_p2 = fold(conv_w(ks[2], mid, in_c, 1), conv_b(ks[3], mid), bn(mid, 0.2))
    w_m,  b_m  = fold(conv_w(ks[4], mid, mid, 1),  conv_b(ks[5], mid), bn(mid, 0.3))
    w_e1, b_e1 = fold(conv_w(ks[6], outh, midh, 3), conv_b(ks[7], outh), bn(outh, 0.4))
    w_e2, b_e2 = fold(conv_w(ks[8], outh, midh, 3), conv_b(ks[9], outh), bn(outh, 0.5))
    w_f,  b_f  = fold(conv_w(ks[10], out_c, out_c, 1), conv_b(ks[11], out_c), bn(out_c, 0.6))
    return dict(w_p1=w_p1, b_p1=b_p1, w_p2=w_p2, b_p2=b_p2, w_m=w_m, b_m=b_m,
                w_e1=w_e1, b_e1=b_e1, w_e2=w_e2, b_e2=b_e2, w_f=w_f, b_f=b_f,
                mid=mid, midh=midh, outh=outh)


def build_kernel_operands(params, H, W, batch_tile):
    """Folded weights as matmul operands for a fixed batch tile.

    Channel-mixing 1x1 matrices are replicated block-diagonally over the batch
    tile (they are tiny), so every matmul in the kernel sees M = bt * channels
    while activations stay a single lane-dense (rows, HW) slab.
    """
    bt = batch_tile
    mid, midh, outh = params["mid"], params["midh"], params["outh"]
    out_c = params["w_f"].shape[0]
    assert mid == 2 * midh and out_c == 2 * outh, "channel split assumes even sizes"

    p = max(H // 2, 2)
    Ph, Pw = adaptive_pool_matrix(H, p), adaptive_pool_matrix(W, p)
    P2 = np.kron(Ph, Pw)                                  # (p*p, HW)
    Uh, Uw = bilinear_matrix(p, H), bilinear_matrix(p, W)
    U = np.kron(Uh, Uw)                                   # (HW, p*p)

    def m(w):                                             # (cout,cin,1,1) -> (cout,cin)
        return np.asarray(w)[:, :, 0, 0]

    def bdiag(mat, n):                                    # kron(I_n, mat)
        return np.kron(np.eye(n, dtype=np.float32), mat).astype(np.float32)

    def btile(vec, n):                                    # per-batch-replicated column bias
        return np.tile(np.asarray(vec, np.float32).reshape(-1), n).reshape(-1, 1)

    # pool1/pool2 1x1 convs: rows [0:bt*mid] = pool1 (block-diag over batch),
    # rows [bt*mid:2*bt*mid] = pool2 (block-diag over batch).
    W12 = np.concatenate([bdiag(m(params["w_p1"]), bt),
                          bdiag(m(params["w_p2"]), bt)], axis=0)        # (2*bt*mid, bt*C)
    b12 = np.concatenate([btile(params["b_p1"], bt),
                          btile(params["b_p2"], bt)], axis=0)           # (2*bt*mid, 1)
    Wm = bdiag(m(params["w_m"]), bt)                                    # (bt*mid, bt*mid)
    bm = btile(params["b_m"], bt)

    we1, we2 = np.asarray(params["w_e1"]), np.asarray(params["w_e2"])
    # Stacked per-tap (tap-major), block-diag over batch tile and over the two
    # channel halves (expand1 / expand2).
    We = np.zeros((9 * bt * out_c, bt * mid), np.float32)
    for dh in range(3):
        for dw in range(3):
            t = dh * 3 + dw
            for b in range(bt):
                r0, c0 = t * bt * out_c + b * out_c, b * mid
                We[r0:r0 + outh, c0:c0 + midh] = we1[:, :, dh, dw]
                We[r0 + outh:r0 + out_c, c0 + midh:c0 + mid] = we2[:, :, dh, dw]
    be = btile(np.concatenate([np.asarray(params["b_e1"]),
                               np.asarray(params["b_e2"])]), bt)        # (bt*out_c, 1)
    Wf = bdiag(m(params["w_f"]), bt)                                    # (bt*out_c, bt*out_c)
    bf = btile(params["b_f"], bt)

    bf16, f32 = jnp.bfloat16, jnp.float32
    return dict(
        P2T=jnp.asarray(P2.T, bf16), UT=jnp.asarray(U.T, bf16),
        W12=jnp.asarray(W12, bf16), b12=jnp.asarray(b12, f32),
        Wm=jnp.asarray(Wm, bf16), bm=jnp.asarray(bm, f32),
        We=jnp.asarray(We, bf16), be=jnp.asarray(be, f32),
        Wf=jnp.asarray(Wf, bf16), bf=jnp.asarray(bf, f32),
        masks=jnp.asarray(tap_masks(H, W), f32),
    )


# ----------------------------------------------------------------------------
# One-time probe: does this JAX build accept pipeline_mode=pl.Buffered(1)?
# (Narrow detection instead of a bare except around the whole forward.)
# ----------------------------------------------------------------------------
def _probe_copy_kernel(x_ref, o_ref):
    o_ref[...] = x_ref[...]


@functools.lru_cache(maxsize=1)
def _buffered_single_supported():
    if not hasattr(pl, "Buffered"):
        return False
    try:
        fn = pl.pallas_call(
            _probe_copy_kernel,
            out_shape=jax.ShapeDtypeStruct((8, 128), jnp.float32),
            grid_spec=pltpu.PrefetchScalarGridSpec(
                num_scalar_prefetch=0, grid=(1,),
                in_specs=[pl.BlockSpec((8, 128), lambda i: (0, 0),
                                       pipeline_mode=pl.Buffered(1))],
                out_specs=pl.BlockSpec((8, 128), lambda i: (0, 0))),
        )
        jax.block_until_ready(fn(jnp.zeros((8, 128), jnp.float32)))
        return True
    except Exception:
        return False


def _const_spec(shape, single_buffer):
    """Full-array spec for a grid-invariant operand."""
    idx = (lambda g: (0, 0)) if len(shape) == 2 else (lambda g: (0, 0, 0))
    if single_buffer:
        return pl.BlockSpec(shape, idx, pipeline_mode=pl.Buffered(1))
    return pl.BlockSpec(shape, idx)


# ----------------------------------------------------------------------------
# Wrapper: NCHW f32 in / NCHW bf16 out, jitted, batch-tiled parallel grid.
# ----------------------------------------------------------------------------
@functools.partial(jax.jit, static_argnames=("batch_tile", "single_buffer_consts"))
def _forward_impl(x_nchw, ops, *, batch_tile, single_buffer_consts):
    B, C, H, W = x_nchw.shape
    HW = H * W
    bt = batch_tile
    assert B % bt == 0, "batch_tile must divide the batch"
    PP = ops["P2T"].shape[1]
    MIDbt = ops["Wm"].shape[0]
    OUTbt = ops["Wf"].shape[0]
    OUT = OUTbt // bt
    assert ops["W12"].shape[1] == bt * C, "operands built for a different batch_tile/C"
    assert ops["P2T"].shape[0] == HW, "operands built for a different H,W"

    # Free reshape (no HBM pass, no dtype convert): kernel reads f32 directly.
    xf = x_nchw.reshape(B * C, HW)

    cs = functools.partial(_const_spec, single_buffer=single_buffer_consts)
    in_specs = [
        pl.BlockSpec((bt * C, HW), lambda g: (g, 0)),         # x tile (f32, cast in kernel)
        cs((HW, PP)),                                         # P2^T  (pool operator)
        cs((2 * MIDbt, bt * C)), cs((2 * MIDbt, 1)),          # W12, b12
        cs((PP, HW)),                                         # U^T   (upsample operator)
        cs((MIDbt, MIDbt)), cs((MIDbt, 1)),                   # Wm, bm
        cs((9 * OUTbt, MIDbt)), cs((OUTbt, 1)),               # We (stacked taps), be
        cs((OUTbt, OUTbt)), cs((OUTbt, 1)),                   # Wf, bf
        cs((9, 1, HW)),                                       # 3x3 tap border masks
    ]

    out_flat = pl.pallas_call(
        functools.partial(_lmca_kernel, width=W),
        out_shape=jax.ShapeDtypeStruct((B * OUT, HW), jnp.bfloat16),
        grid_spec=pltpu.PrefetchScalarGridSpec(
            num_scalar_prefetch=0,
            grid=(B // bt,),            # keep >= 2 steps so v7x dual-TC shards the batch
            in_specs=in_specs,
            out_specs=pl.BlockSpec((bt * OUT, HW), lambda g: (g, 0)),
        ),
        compiler_params=pltpu.CompilerParams(
            dimension_semantics=("parallel",),
            vmem_limit_bytes=32 * 1024 * 1024),
    )(xf, ops["P2T"], ops["W12"], ops["b12"], ops["UT"], ops["Wm"], ops["bm"],
      ops["We"], ops["be"], ops["Wf"], ops["bf"], ops["masks"])

    return out_flat.reshape(B, OUT, H, W)     # free reshape


def enhanced_separable_conv3_forward(x_nchw, ops, *, batch_tile):
    single = _buffered_single_supported()     # detected once, outside jit
    return _forward_impl(x_nchw, ops, batch_tile=batch_tile,
                         single_buffer_consts=single)


# ----------------------------------------------------------------------------
# Pure-JAX reference (real pooling / lax conv, f32 HIGHEST) for validation.
# ----------------------------------------------------------------------------
def reference_forward(x_nchw, params):
    hp = lax.Precision.HIGHEST
    x = jnp.transpose(x_nchw, (0, 2, 3, 1)).astype(jnp.float32)      # NHWC
    B, H, W, C = x.shape
    p = max(H // 2, 2)
    assert H % p == 0 and W % p == 0
    xp = x.reshape(B, p, H // p, p, W // p, C).mean(axis=(2, 4))

    def conv1x1(t, w, b):
        return jnp.einsum('bhwc,oc->bhwo', t, w[:, :, 0, 0], precision=hp) + b

    p1 = _relu6(conv1x1(xp, params["w_p1"], params["b_p1"]))
    p2 = _relu6(conv1x1(xp, params["w_p2"], params["b_p2"]))
    pooled = p1 * p2
    Uh = jnp.asarray(bilinear_matrix(p, H))
    Uw = jnp.asarray(bilinear_matrix(p, W))
    up = jnp.einsum('Hh,bhwc->bHwc', Uh, pooled, precision=hp)
    up = jnp.einsum('Ww,bhwc->bhWc', Uw, up, precision=hp)
    main = _relu6(conv1x1(up, params["w_m"], params["b_m"]))
    midh = params["midh"]
    s1, s2 = main[..., :midh], main[..., midh:]
    dn = ('NHWC', 'HWIO', 'NHWC')
    k1 = jnp.transpose(params["w_e1"], (2, 3, 1, 0))
    k2 = jnp.transpose(params["w_e2"], (2, 3, 1, 0))
    e1 = _relu6(lax.conv_general_dilated(s1, k1, (1, 1), [(1, 1), (1, 1)],
                                         dimension_numbers=dn, precision=hp)
                + params["b_e1"])
    e2 = _relu6(lax.conv_general_dilated(s2, k2, (1, 1), [(1, 1), (1, 1)],
                                         dimension_numbers=dn, precision=hp)
                + params["b_e2"])
    fused = jnp.concatenate([e1, e2], axis=-1)
    out = conv1x1(fused, params["w_f"], params["b_f"])
    return jnp.transpose(out, (0, 3, 1, 2))


if __name__ == "__main__":
    # Small demo shapes; B=4 with batch_tile=2 -> 2 grid steps (v7x dual-TC),
    # each step working on a (16, 256) lane-dense slab.
    B, IN_C, OUT_C, H, W = 4, 8, 8, 16, 16
    BT = 2
    key = jax.random.PRNGKey(0)
    k_param, k_x = jax.random.split(key)

    params = build_module_params(k_param, IN_C, OUT_C)
    ops = build_kernel_operands(params, H, W, batch_tile=BT)
    x = jax.random.normal(k_x, (B, IN_C, H, W), jnp.float32)

    out = jax.block_until_ready(
        enhanced_separable_conv3_forward(x, ops, batch_tile=BT))
    assert out.shape == (B, OUT_C, H, W), out.shape
    assert out.dtype == jnp.bfloat16, out.dtype

    ref = reference_forward(x, params)
    out_f = np.asarray(out, dtype=np.float32)
    ref_f = np.asarray(ref, dtype=np.float32)
    max_err = float(np.max(np.abs(out_f - ref_f)))
    # Kernel feeds the MXU bf16 operands (f32 accumulation) and stores bf16;
    # reference is f32 HIGHEST precision, so allow bf16-level tolerance.
    if not np.allclose(out_f, ref_f, rtol=5e-2, atol=1e-1):
        raise AssertionError(f"Pallas kernel mismatch vs reference, max abs err={max_err}")
    print("KERNEL_OK")
</pallas_src>

<mosaic_0001>
module attributes {stable_mosaic.version = 11 : i64} {
  func.func @_probe_copy_kernel(%arg0: i32, %arg1: memref<8x128xf32, #tpu.memory_space<vmem>>, %arg2: memref<8x128xf32, #tpu.memory_space<vmem>>) attributes {dimension_semantics = [#tpu.dimension_semantics<arbitrary>], iteration_bounds = array<i64: 1>, scalar_prefetch = 0 : i64, scratch_operands = 0 : i64, tpu.core_type = #tpu.core_type<tc>, window_params = [{pipeline_mode = #tpu.pipeline_mode<synchronous>, transform_indices = @transform_0, window_bounds = array<i64: 8, 128>}, {pipeline_mode = #tpu.pipeline_mode<synchronous>, transform_indices = @transform_1, window_bounds = array<i64: 8, 128>}]} {
    %c0 = arith.constant 0 : index
    %c0_0 = arith.constant 0 : index
    %0 = vector.load %arg1[%c0, %c0_0] : memref<8x128xf32, #tpu.memory_space<vmem>>, vector<8x128xf32>
    %c0_1 = arith.constant 0 : index
    %c0_2 = arith.constant 0 : index
    %1 = vector.load %arg2[%c0_1, %c0_2] : memref<8x128xf32, #tpu.memory_space<vmem>>, vector<8x128xf32>
    tpu.vector_store %arg2[%c0_1, %c0_2], %0 {strides = array<i32>} : memref<8x128xf32, #tpu.memory_space<vmem>>, vector<8x128xf32>,
    return
  }
  func.func @transform_0(%arg0: i32) -> (i32, i32) {
    %c0_i32 = arith.constant 0 : i32
    %c0_i32_0 = arith.constant 0 : i32
    %c0_i32_1 = arith.constant 0 : i32
    return %c0_i32, %c0_i32_0 : i32, i32
  }
  func.func @transform_1(%arg0: i32) -> (i32, i32) {
    %c0_i32 = arith.constant 0 : i32
    %c0_i32_0 = arith.constant 0 : i32
    %c0_i32_1 = arith.constant 0 : i32
    return %c0_i32, %c0_i32_0 : i32, i32
  }
}

module attributes {stable_mosaic.version = 11 : i64} {
  func.func @_lmca_kernel(%arg0: i32, %arg1: memref<16x256xf32, #tpu.memory_space<vmem>>, %arg2: memref<256x64xbf16, #tpu.memory_space<vmem>>, %arg3: memref<16x16xbf16, #tpu.memory_space<vmem>>, %arg4: memref<16x1xf32, #tpu.memory_space<vmem>>, %arg5: memref<64x256xbf16, #tpu.memory_space<vmem>>, %arg6: memref<8x8xbf16, #tpu.memory_space<vmem>>, %arg7: memref<8x1xf32, #tpu.memory_space<vmem>>, %arg8: memref<144x8xbf16, #tpu.memory_space<vmem>>, %arg9: memref<16x1xf32, #tpu.memory_space<vmem>>, %arg10: memref<16x16xbf16, #tpu.memory_space<vmem>>, %arg11: memref<16x1xf32, #tpu.memory_space<vmem>>, %arg12: memref<9x1x256xf32, #tpu.memory_space<vmem>>, %arg13: memref<16x256xbf16, #tpu.memory_space<vmem>>) attributes {dimension_semantics = [#tpu.dimension_semantics<parallel>], iteration_bounds = array<i64: 2>, scalar_prefetch = 0 : i64, scratch_operands = 0 : i64, tpu.core_type = #tpu.core_type<tc>, window_params = [{transform_indices = @transform_0, window_bounds = array<i64: 16, 256>}, {pipeline_mode = #tpu.pipeline_mode<synchronous>, transform_indices = @transform_1, window_bounds = array<i64: 256, 64>}, {pipeline_mode = #tpu.pipeline_mode<synchronous>, transform_indices = @transform_2, window_bounds = array<i64: 16, 16>}, {pipeline_mode = #tpu.pipeline_mode<synchronous>, transform_indices = @transform_3, window_bounds = array<i64: 16, 1>}, {pipeline_mode = #tpu.pipeline_mode<synchronous>, transform_indices = @transform_4, window_bounds = array<i64: 64, 256>}, {pipeline_mode = #tpu.pipeline_mode<synchronous>, transform_indices = @transform_5, window_bounds = array<i64: 8, 8>}, {pipeline_mode = #tpu.pipeline_mode<synchronous>, transform_indices = @transform_6, window_bounds = array<i64: 8, 1>}, {pipeline_mode = #tpu.pipeline_mode<synchronous>, transform_indices = @transform_7, window_bounds = array<i64: 144, 8>}, {pipeline_mode = #tpu.pipeline_mode<synchronous>, transform_indices = @transform_8, window_bounds = array<i64: 16, 1>}, {pipeline_mode = #tpu.pipeline_mode<synchronous>, transform_indices = @transform_9, window_bounds = array<i64: 16, 16>}, {pipeline_mode = #tpu.pipeline_mode<synchronous>, transform_indices = @transform_10, window_bounds = array<i64: 16, 1>}, {pipeline_mode = #tpu.pipeline_mode<synchronous>, transform_indices = @transform_11, window_bounds = array<i64: 9, 1, 256>}, {transform_indices = @transform_12, window_bounds = array<i64: 16, 256>}]} {
    %c0 = arith.constant 0 : index
    %c0_0 = arith.constant 0 : index
    %0 = vector.load %arg1[%c0, %c0_0] : memref<16x256xf32, #tpu.memory_space<vmem>>, vector<16x256xf32>
    %1 = arith.truncf %0 : vector<16x256xf32> to vector<16x256xbf16>
    %c0_1 = arith.constant 0 : index
    %c0_2 = arith.constant 0 : index
    %2 = vector.load %arg2[%c0_1, %c0_2] : memref<256x64xbf16, #tpu.memory_space<vmem>>, vector<256x64xbf16>
    %cst = arith.constant dense<0.000000e+00> : vector<16x64xf32>
    %3 = tpu.matmul %1, %2, %cst {dimension_numbers = #tpu.dot_dimension_numbers<[1], [0], [0], [1], [0, 0, 1, 1], [], []>} : vector<16x256xbf16>, vector<256x64xbf16>, vector<16x64xf32> -> vector<16x64xf32>
    %c0_3 = arith.constant 0 : index
    %c0_4 = arith.constant 0 : index
    %4 = vector.load %arg3[%c0_3, %c0_4] : memref<16x16xbf16, #tpu.memory_space<vmem>>, vector<16x16xbf16>
    %5 = arith.truncf %3 : vector<16x64xf32> to vector<16x64xbf16>
    %cst_5 = arith.constant dense<0.000000e+00> : vector<16x64xf32>
    %6 = tpu.matmul %4, %5, %cst_5 {dimension_numbers = #tpu.dot_dimension_numbers<[1], [0], [0], [1], [0, 0, 1, 1], [], []>} : vector<16x16xbf16>, vector<16x64xbf16>, vector<16x64xf32> -> vector<16x64xf32>
    %c0_6 = arith.constant 0 : index
    %c0_7 = arith.constant 0 : index
    %7 = vector.load %arg4[%c0_6, %c0_7] : memref<16x1xf32, #tpu.memory_space<vmem>>, vector<16x1xf32>
    %8 = vector.broadcast %7 : vector<16x1xf32> to vector<16x64xf32>
    %9 = arith.addf %6, %8 : vector<16x64xf32>
    %cst_8 = arith.constant 0.000000e+00 : f32
    %cst_9 = arith.constant 6.000000e+00 : f32
    %10 = vector.broadcast %cst_8 : f32 to vector<16x64xf32>
    %11 = arith.maximumf %10, %9 : vector<16x64xf32>
    %12 = vector.broadcast %cst_9 : f32 to vector<16x64xf32>
    %13 = arith.minimumf %12, %11 : vector<16x64xf32>
    %14 = vector.extract_strided_slice %13 {offsets = [0, 0], sizes = [8, 64], strides = [1, 1]} : vector<16x64xf32> to vector<8x64xf32>
    %15 = vector.extract_strided_slice %13 {offsets = [8, 0], sizes = [8, 64], strides = [1, 1]} : vector<16x64xf32> to vector<8x64xf32>
    %16 = arith.mulf %14, %15 : vector<8x64xf32>
    %17 = arith.truncf %16 : vector<8x64xf32> to vector<8x64xbf16>
    %c0_10 = arith.constant 0 : index
    %c0_11 = arith.constant 0 : index
    %18 = vector.load %arg5[%c0_10, %c0_11] : memref<64x256xbf16, #tpu.memory_space<vmem>>, vector<64x256xbf16>
    %cst_12 = arith.constant dense<0.000000e+00> : vector<8x256xf32>
    %19 = tpu.matmul %17, %18, %cst_12 {dimension_numbers = #tpu.dot_dimension_numbers<[1], [0], [0], [1], [0, 0, 1, 1], [], []>} : vector<8x64xbf16>, vector<64x256xbf16>, vector<8x256xf32> -> vector<8x256xf32>
    %c0_13 = arith.constant 0 : index
    %c0_14 = arith.constant 0 : index
    %20 = vector.load %arg6[%c0_13, %c0_14] : memref<8x8xbf16, #tpu.memory_space<vmem>>, vector<8x8xbf16>
    %21 = arith.truncf %19 : vector<8x256xf32> to vector<8x256xbf16>
    %cst_15 = arith.constant dense<0.000000e+00> : vector<8x256xf32>
    %22 = tpu.matmul %20, %21, %cst_15 {dimension_numbers = #tpu.dot_dimension_numbers<[1], [0], [0], [1], [0, 0, 1, 1], [], []>} : vector<8x8xbf16>, vector<8x256xbf16>, vector<8x256xf32> -> vector<8x256xf32>
    %c0_16 = arith.constant 0 : index
    %c0_17 = arith.constant 0 : index
    %23 = vector.load %arg7[%c0_16, %c0_17] : memref<8x1xf32, #tpu.memory_space<vmem>>, vector<8x1xf32>
    %24 = vector.broadcast %23 : vector<8x1xf32> to vector<8x256xf32>
    %25 = arith.addf %22, %24 : vector<8x256xf32>
    %cst_18 = arith.constant 0.000000e+00 : f32
    %cst_19 = arith.constant 6.000000e+00 : f32
    %26 = vector.broadcast %cst_18 : f32 to vector<8x256xf32>
    %27 = arith.maximumf %26, %25 : vector<8x256xf32>
    %28 = vector.broadcast %cst_19 : f32 to vector<8x256xf32>
    %29 = arith.minimumf %28, %27 : vector<8x256xf32>
    %c0_20 = arith.constant 0 : index
    %c0_21 = arith.constant 0 : index
    %30 = vector.load %arg8[%c0_20, %c0_21] : memref<144x8xbf16, #tpu.memory_space<vmem>>, vector<144x8xbf16>
    %31 = arith.truncf %29 : vector<8x256xf32> to vector<8x256xbf16>
    %cst_22 = arith.constant dense<0.000000e+00> : vector<144x256xf32>
    %32 = tpu.matmul %30, %31, %cst_22 {dimension_numbers = #tpu.dot_dimension_numbers<[1], [0], [0], [1], [0, 0, 1, 1], [], []>} : vector<144x8xbf16>, vector<8x256xbf16>, vector<144x256xf32> -> vector<144x256xf32>
    %33 = vector.extract_strided_slice %32 {offsets = [64, 0], sizes = [16, 256], strides = [1, 1]} : vector<144x256xf32> to vector<16x256xf32>
    %34 = vector.extract_strided_slice %32 {offsets = [0, 0], sizes = [16, 256], strides = [1, 1]} : vector<144x256xf32> to vector<16x256xf32>
    %c17_i32 = arith.constant 17 : i32
    %35 = tpu.dynamic_rotate %34 by %c17_i32 dim 1 : vector<16x256xf32>, i32 -> vector<16x256xf32>
    %c0_23 = arith.constant 0 : index
    %c0_24 = arith.constant 0 : index
    %c0_25 = arith.constant 0 : index
    %36 = vector.load %arg12[%c0_23, %c0_24, %c0_25] : memref<9x1x256xf32, #tpu.memory_space<vmem>>, vector<1x1x256xf32>
    %37 = vector.shape_cast %36 : vector<1x1x256xf32> to vector<1x256xf32>
    %38 = vector.broadcast %37 : vector<1x256xf32> to vector<16x256xf32>
    %39 = arith.mulf %35, %38 : vector<16x256xf32>
    %40 = arith.addf %33, %39 : vector<16x256xf32>
    %41 = vector.extract_strided_slice %32 {offsets = [16, 0], sizes = [16, 256], strides = [1, 1]} : vector<144x256xf32> to vector<16x256xf32>
    %c16_i32 = arith.constant 16 : i32
    %42 = tpu.dynamic_rotate %41 by %c16_i32 dim 1 : vector<16x256xf32>, i32 -> vector<16x256xf32>
    %c1 = arith.constant 1 : index
    %c0_26 = arith.constant 0 : index
    %c0_27 = arith.constant 0 : index
    %43 = vector.load %arg12[%c1, %c0_26, %c0_27] : memref<9x1x256xf32, #tpu.memory_space<vmem>>, vector<1x1x256xf32>
    %44 = vector.shape_cast %43 : vector<1x1x256xf32> to vector<1x256xf32>
    %45 = vector.broadcast %44 : vector<1x256xf32> to vector<16x256xf32>
    %46 = arith.mulf %42, %45 : vector<16x256xf32>
    %47 = arith.addf %40, %46 : vector<16x256xf32>
    %48 = vector.extract_strided_slice %32 {offsets = [32, 0], sizes = [16, 256], strides = [1, 1]} : vector<144x256xf32> to vector<16x256xf32>
    %c15_i32 = arith.constant 15 : i32
    %49 = tpu.dynamic_rotate %48 by %c15_i32 dim 1 : vector<16x256xf32>, i32 -> vector<16x256xf32>
    %c2 = arith.constant 2 : index
    %c0_28 = arith.constant 0 : index
    %c0_29 = arith.constant 0 : index
    %50 = vector.load %arg12[%c2, %c0_28, %c0_29] : memref<9x1x256xf32, #tpu.memory_space<vmem>>, vector<1x1x256xf32>
    %51 = vector.shape_cast %50 : vector<1x1x256xf32> to vector<1x256xf32>
    %52 = vector.broadcast %51 : vector<1x256xf32> to vector<16x256xf32>
    %53 = arith.mulf %49, %52 : vector<16x256xf32>
    %54 = arith.addf %47, %53 : vector<16x256xf32>
    %55 = vector.extract_strided_slice %32 {offsets = [48, 0], sizes = [16, 256], strides = [1, 1]} : vector<144x256xf32> to vector<16x256xf32>
    %c1_i32 = arith.constant 1 : i32
    %56 = tpu.dynamic_rotate %55 by %c1_i32 dim 1 : vector<16x256xf32>, i32 -> vector<16x256xf32>
    %c3 = arith.constant 3 : index
    %c0_30 = arith.constant 0 : index
    %c0_31 = arith.constant 0 : index
    %57 = vector.load %arg12[%c3, %c0_30, %c0_31] : memref<9x1x256xf32, #tpu.memory_space<vmem>>, vector<1x1x256xf32>
    %58 = vector.shape_cast %57 : vector<1x1x256xf32> to vector<1x256xf32>
    %59 = vector.broadcast %58 : vector<1x256xf32> to vector<16x256xf32>
    %60 = arith.mulf %56, %59 : vector<16x256xf32>
    %61 = arith.addf %54, %60 : vector<16x256xf32>
    %62 = vector.extract_strided_slice %32 {offsets = [80, 0], sizes = [16, 256], strides = [1, 1]} : vector<144x256xf32> to vector<16x256xf32>
    %c255_i32 = arith.constant 255 : i32
    %63 = tpu.dynamic_rotate %62 by %c255_i32 dim 1 : vector<16x256xf32>, i32 -> vector<16x256xf32>
    %c5 = arith.constant 5 : index
    %c0_32 = arith.constant 0 : index
    %c0_33 = arith.constant 0 : index
    %64 = vector.load %arg12[%c5, %c0_32, %c0_33] : memref<9x1x256xf32, #tpu.memory_space<vmem>>, vector<1x1x256xf32>
    %65 = vector.shape_cast %64 : vector<1x1x256xf32> to vector<1x256xf32>
    %66 = vector.broadcast %65 : vector<1x256xf32> to vector<16x256xf32>
    %67 = arith.mulf %63, %66 : vector<16x256xf32>
    %68 = arith.addf %61, %67 : vector<16x256xf32>
    %69 = vector.extract_strided_slice %32 {offsets = [96, 0], sizes = [16, 256], strides = [1, 1]} : vector<144x256xf32> to vector<16x256xf32>
    %c241_i32 = arith.constant 241 : i32
    %70 = tpu.dynamic_rotate %69 by %c241_i32 dim 1 : vector<16x256xf32>, i32 -> vector<16x256xf32>
    %c6 = arith.constant 6 : index
    %c0_34 = arith.constant 0 : index
    %c0_35 = arith.constant 0 : index
    %71 = vector.load %arg12[%c6, %c0_34, %c0_35] : memref<9x1x256xf32, #tpu.memory_space<vmem>>, vector<1x1x256xf32>
    %72 = vector.shape_cast %71 : vector<1x1x256xf32> to vector<1x256xf32>
    %73 = vector.broadcast %72 : vector<1x256xf32> to vector<16x256xf32>
    %74 = arith.mulf %70, %73 : vector<16x256xf32>
    %75 = arith.addf %68, %74 : vector<16x256xf32>
    %76 = vector.extract_strided_slice %32 {offsets = [112, 0], sizes = [16, 256], strides = [1, 1]} : vector<144x256xf32> to vector<16x256xf32>
    %c240_i32 = arith.constant 240 : i32
    %77 = tpu.dynamic_rotate %76 by %c240_i32 dim 1 : vector<16x256xf32>, i32 -> vector<16x256xf32>
    %c7 = arith.constant 7 : index
    %c0_36 = arith.constant 0 : index
    %c0_37 = arith.constant 0 : index
    %78 = vector.load %arg12[%c7, %c0_36, %c0_37] : memref<9x1x256xf32, #tpu.memory_space<vmem>>, vector<1x1x256xf32>
    %79 = vector.shape_cast %78 : vector<1x1x256xf32> to vector<1x256xf32>
    %80 = vector.broadcast %79 : vector<1x256xf32> to vector<16x256xf32>
    %81 = arith.mulf %77, %80 : vector<16x256xf32>
    %82 = arith.addf %75, %81 : vector<16x256xf32>
    %83 = vector.extract_strided_slice %32 {offsets = [128, 0], sizes = [16, 256], strides = [1, 1]} : vector<144x256xf32> to vector<16x256xf32>
    %c239_i32 = arith.constant 239 : i32
    %84 = tpu.dynamic_rotate %83 by %c239_i32 dim 1 : vector<16x256xf32>, i32 -> vector<16x256xf32>
    %c8 = arith.constant 8 : index
    %c0_38 = arith.constant 0 : index
    %c0_39 = arith.constant 0 : index
    %85 = vector.load %arg12[%c8, %c0_38, %c0_39] : memref<9x1x256xf32, #tpu.memory_space<vmem>>, vector<1x1x256xf32>
    %86 = vector.shape_cast %85 : vector<1x1x256xf32> to vector<1x256xf32>
    %87 = vector.broadcast %86 : vector<1x256xf32> to vector<16x256xf32>
    %88 = arith.mulf %84, %87 : vector<16x256xf32>
    %89 = arith.addf %82, %88 : vector<16x256xf32>
    %c0_40 = arith.constant 0 : index
    %c0_41 = arith.constant 0 : index
    %90 = vector.load %arg9[%c0_40, %c0_41] : memref<16x1xf32, #tpu.memory_space<vmem>>, vector<16x1xf32>
    %91 = vector.broadcast %90 : vector<16x1xf32> to vector<16x256xf32>
    %92 = arith.addf %89, %91 : vector<16x256xf32>
    %cst_42 = arith.constant 0.000000e+00 : f32
    %cst_43 = arith.constant 6.000000e+00 : f32
    %93 = vector.broadcast %cst_42 : f32 to vector<16x256xf32>
    %94 = arith.maximumf %93, %92 : vector<16x256xf32>
    %95 = vector.broadcast %cst_43 : f32 to vector<16x256xf32>
    %96 = arith.minimumf %95, %94 : vector<16x256xf32>
    %c0_44 = arith.constant 0 : index
    %c0_45 = arith.constant 0 : index
    %97 = vector.load %arg10[%c0_44, %c0_45] : memref<16x16xbf16, #tpu.memory_space<vmem>>, vector<16x16xbf16>
    %98 = arith.truncf %96 : vector<16x256xf32> to vector<16x256xbf16>
    %cst_46 = arith.constant dense<0.000000e+00> : vector<16x256xf32>
    %99 = tpu.matmul %97, %98, %cst_46 {dimension_numbers = #tpu.dot_dimension_numbers<[1], [0], [0], [1], [0, 0, 1, 1], [], []>} : vector<16x16xbf16>, vector<16x256xbf16>, vector<16x256xf32> -> vector<16x256xf32>
    %c0_47 = arith.constant 0 : index
    %c0_48 = arith.constant 0 : index
    %100 = vector.load %arg11[%c0_47, %c0_48] : memref<16x1xf32, #tpu.memory_space<vmem>>, vector<16x1xf32>
    %101 = vector.broadcast %100 : vector<16x1xf32> to vector<16x256xf32>
    %102 = arith.addf %99, %101 : vector<16x256xf32>
    %103 = arith.truncf %102 : vector<16x256xf32> to vector<16x256xbf16>
    %c0_49 = arith.constant 0 : index
    %c0_50 = arith.constant 0 : index
    %104 = vector.load %arg13[%c0_49, %c0_50] : memref<16x256xbf16, #tpu.memory_space<vmem>>, vector<16x256xbf16>
    tpu.vector_store %arg13[%c0_49, %c0_50], %103 {strides = array<i32>} : memref<16x256xbf16, #tpu.memory_space<vmem>>, vector<16x256xbf16>,
    return
  }
  func.func @transform_0(%arg0: i32) -> (i32, i32) {
    %c0_i32 = arith.constant 0 : i32
    %c0_i32_0 = arith.constant 0 : i32
    return %arg0, %c0_i32 : i32, i32
  }
  func.func @transform_1(%arg0: i32) -> (i32, i32) {
    %c0_i32 = arith.constant 0 : i32
    %c0_i32_0 = arith.constant 0 : i32
    %c0_i32_1 = arith.constant 0 : i32
    return %c0_i32, %c0_i32_0 : i32, i32
  }
  func.func @transform_2(%arg0: i32) -> (i32, i32) {
    %c0_i32 = arith.constant 0 : i32
    %c0_i32_0 = arith.constant 0 : i32
    %c0_i32_1 = arith.constant 0 : i32
    return %c0_i32, %c0_i32_0 : i32, i32
  }
  func.func @transform_3(%arg0: i32) -> (i32, i32) {
    %c0_i32 = arith.constant 0 : i32
    %c0_i32_0 = arith.constant 0 : i32
    %c0_i32_1 = arith.constant 0 : i32
    return %c0_i32, %c0_i32_0 : i32, i32
  }
  func.func @transform_4(%arg0: i32) -> (i32, i32) {
    %c0_i32 = arith.constant 0 : i32
    %c0_i32_0 = arith.constant 0 : i32
    %c0_i32_1 = arith.constant 0 : i32
    return %c0_i32, %c0_i32_0 : i32, i32
  }
  func.func @transform_5(%arg0: i32) -> (i32, i32) {
    %c0_i32 = arith.constant 0 : i32
    %c0_i32_0 = arith.constant 0 : i32
    %c0_i32_1 = arith.constant 0 : i32
    return %c0_i32, %c0_i32_0 : i32, i32
  }
  func.func @transform_6(%arg0: i32) -> (i32, i32) {
    %c0_i32 = arith.constant 0 : i32
    %c0_i32_0 = arith.constant 0 : i32
    %c0_i32_1 = arith.constant 0 : i32
    return %c0_i32, %c0_i32_0 : i32, i32
  }
  func.func @transform_7(%arg0: i32) -> (i32, i32) {
    %c0_i32 = arith.constant 0 : i32
    %c0_i32_0 = arith.constant 0 : i32
    %c0_i32_1 = arith.constant 0 : i32
    return %c0_i32, %c0_i32_0 : i32, i32
  }
  func.func @transform_8(%arg0: i32) -> (i32, i32) {
    %c0_i32 = arith.constant 0 : i32
    %c0_i32_0 = arith.constant 0 : i32
    %c0_i32_1 = arith.constant 0 : i32
    return %c0_i32, %c0_i32_0 : i32, i32
  }
  func.func @transform_9(%arg0: i32) -> (i32, i32) {
    %c0_i32 = arith.constant 0 : i32
    %c0_i32_0 = arith.constant 0 : i32
    %c0_i32_1 = arith.constant 0 : i32
    return %c0_i32, %c0_i32_0 : i32, i32
  }
  func.func @transform_10(%arg0: i32) -> (i32, i32) {
    %c0_i32 = arith.constant 0 : i32
    %c0_i32_0 = arith.constant 0 : i32
    %c0_i32_1 = arith.constant 0 : i32
    return %c0_i32, %c0_i32_0 : i32, i32
  }
  func.func @transform_11(%arg0: i32) -> (i32, i32, i32) {
    %c0_i32 = arith.constant 0 : i32
    %c0_i32_0 = arith.constant 0 : i32
    %c0_i32_1 = arith.constant 0 : i32
    %c0_i32_2 = arith.constant 0 : i32
    return %c0_i32, %c0_i32_0, %c0_i32_1 : i32, i32, i32
  }
  func.func @transform_12(%arg0: i32) -> (i32, i32) {
    %c0_i32 = arith.constant 0 : i32
    %c0_i32_0 = arith.constant 0 : i32
    return %arg0, %c0_i32 : i32, i32
  }
}

</mosaic_0001>

<llo_original>
// kernel: tpu_custom_call.1
$region0: #{tpu_custom_call.1}
  #allocation0 [shape = 'u32[]', space=smem, size = 0x4, offset = 0x4, fixed_abs, tag = 'smem constant byte address 0x4 - core index']
  #allocation1 [shape = 'u32[72,128]{1,0:T(1,128)}', space=vmem, size = 0x9000, scoped, tag = 'internal scratch']
  %s0 = inlined_call_operand.hbm [shape: f32[8,128], index: 0, kind: input, shape index: {}]
  %s1 = inlined_call_operand.hbm [shape: f32[8,128], index: 1, kind: output, shape index: {}]
  %s2 = sld [smem:[#allocation0]]
  $region18: #{tpu_custom_call.1} parent=0
    _
  %s4 = ssub.s32 1, %s2
  %s5 = scalar_select 0, %s4, %s2
  $region1: #{tpu_custom_call.1} parent=0
    #allocation2 [shape = 'u8[4096]{0}', space=vmem, size = 0x1000, scoped, tag = 'input window, operand 0, single buffered']
    #allocation3 [shape = 's32[1]{0}', space=sflag, size = 0x4, scoped, tag = 'scoped memory for tpu_custom_call.1']
    #allocation4 [shape = 's32[1]{0}', space=sflag, size = 0x4, scoped, tag = 'scoped memory for tpu_custom_call.1']
    #allocation5 [shape = 'u8[4096]{0}', space=vmem, size = 0x1000, scoped, tag = 'output window, operand 0, single buffered']
    %6 = vsyncpa [#allocation3], 0
    %7 = vsyncpa [#allocation4], 0
    // Predicated region
    $region2: #{tpu_custom_call.1} parent=1 // pred_check
      _
    $region3: #{tpu_custom_call.1} parent=1 // pred_check_branch
      %9 = sbr.rel (0) target = $region5
    $region4: #{tpu_custom_call.1} parent=1 // pred_region
      %11 = vsyncadd [#allocation3], 0
      %s13 = sshll.u32 %s0, 4
      %s14 = int_to_ptr.hbm [resolvable:$true] %s13
      %s15 = sshll.u32 [#allocation2], 4
      %s16 = int_to_ptr.vmem [resolvable:$true] %s15
      %18 = dma.hbm_to_vmem [thread:$0]  %s14, 128, %s16, [#allocation3]
    $region5: #{tpu_custom_call.1} parent=1 // pred_fallthru
      _
    // Predicated region
    $region6: #{tpu_custom_call.1} parent=1 // pred_check
      _
    $region7: #{tpu_custom_call.1} parent=1 // pred_check_branch
      %20 = sbr.rel (0) target = $region9
    $region8: #{tpu_custom_call.1} parent=1 // pred_region
      %22 = dma.done [#allocation3], 128
    $region9: #{tpu_custom_call.1} parent=1 // pred_fallthru
      _
    %v23 = vld [vmem:[#allocation2] sm:$0xff]
    %24 = vst [vmem:[#allocation5] sm:$0xff] %v23
    // Predicated region
    $region10: #{tpu_custom_call.1} parent=1 // pred_check
      _
    $region11: #{tpu_custom_call.1} parent=1 // pred_check_branch
      %26 = sbr.rel (0) target = $region13
    $region12: #{tpu_custom_call.1} parent=1 // pred_region
      %28 = vsyncadd [#allocation4], 0
      %s30 = sshll.u32 [#allocation5], 4
      %s31 = int_to_ptr.vmem [resolvable:$true] %s30
      %s32 = sshll.u32 %s1, 4
      %s33 = int_to_ptr.hbm [resolvable:$true] %s32
      %35 = dma.vmem_to_hbm [thread:$0]  %s31, 128, %s33, [#allocation4]
    $region13: #{tpu_custom_call.1} parent=1 // pred_fallthru
      _
    // Predicated region
    $region14: #{tpu_custom_call.1} parent=1 // pred_check
      _
    $region15: #{tpu_custom_call.1} parent=1 // pred_check_branch
      %37 = sbr.rel (0) target = $region17
    $region16: #{tpu_custom_call.1} parent=1 // pred_region
      %39 = dma.done [#allocation4], 128
    $region17: #{tpu_custom_call.1} parent=1 // pred_fallthru
      _
    %40 = vsyncpa [#allocation3], 1
    %41 = vsyncpa [#allocation4], 1

// kernel: _forward_impl.1
$region0: #{_forward_impl.1}
  #allocation0 [shape = 'u32[]', space=smem, size = 0x4, offset = 0x4, fixed_abs, tag = 'smem constant byte address 0x4 - core index']
  #allocation1 [shape = 'u32[72,128]{1,0:T(1,128)}', space=vmem, size = 0x9000, scoped, tag = 'internal scratch']
  %s0 = inlined_call_operand.vmem [shape: f32[32,256], index: 0, kind: input, shape index: {}]
  %s1 = inlined_call_operand.vmem [shape: bf16[256,64], index: 1, kind: input, shape index: {}]
  %s2 = inlined_call_operand.vmem [shape: bf16[16,16], index: 2, kind: input, shape index: {}]
  %s3 = inlined_call_operand.vmem [shape: f32[16,1], index: 3, kind: input, shape index: {}]
  %s4 = inlined_call_operand.vmem [shape: bf16[64,256], index: 4, kind: input, shape index: {}]
  %s5 = inlined_call_operand.vmem [shape: bf16[8,8], index: 5, kind: input, shape index: {}]
  %s6 = inlined_call_operand.vmem [shape: f32[8,1], index: 6, kind: input, shape index: {}]
  %s7 = inlined_call_operand.vmem [shape: bf16[144,8], index: 7, kind: input, shape index: {}]
  %s8 = inlined_call_operand.vmem [shape: f32[16,1], index: 8, kind: input, shape index: {}]
  %s9 = inlined_call_operand.vmem [shape: bf16[16,16], index: 9, kind: input, shape index: {}]
  %s10 = inlined_call_operand.vmem [shape: f32[16,1], index: 10, kind: input, shape index: {}]
  %s11 = inlined_call_operand.vmem [shape: f32[9,1,256], index: 11, kind: input, shape index: {}]
  %s12 = inlined_call_operand.vmem [shape: bf16[32,256], index: 12, kind: output, shape index: {}]
  %s13 = sld [smem:[#allocation0]]
  $region81: #{_forward_impl.1} parent=0
    _
  %s15 = ssub.s32 1, %s13
  %s16 = scalar_select 0, %s15, %s13
  loop: start=0, step=1, limit=4
  $region2: #{_forward_impl.1} parent=0 // loop_pre_header
    _
  $region3: #{_forward_impl.1} parent=0 // loop_header
    %s18 = sphi 0, %s22
    %p19 = scmp.ge.s32.totalorder %s18, 4
    %s28 = sphi 0, %s30
    %s31 = sphi 0, %s28
    %s32 = sphi 0, %s31
    %s48 = sphi 0, %s32
    %s52 = sphi 0, %s52
    %s54 = sphi 0, %s52
    %s55 = sphi 0, %s54
    %s69 = sphi 0, %s55
    %s73 = sphi 0, %s73
    %s75 = sphi 0, %s73
    %s76 = sphi 0, %s75
    %s90 = sphi 0, %s76
    %s94 = sphi 0, %s94
    %s96 = sphi 0, %s94
    %s97 = sphi 0, %s96
    %s111 = sphi 0, %s97
    %s115 = sphi 0, %s115
    %s117 = sphi 0, %s115
    %s118 = sphi 0, %s117
    %s132 = sphi 0, %s118
    %s136 = sphi 0, %s136
    %s138 = sphi 0, %s136
    %s139 = sphi 0, %s138
    %s153 = sphi 0, %s139
    %s157 = sphi 0, %s157
    %s159 = sphi 0, %s157
    %s160 = sphi 0, %s159
    %s174 = sphi 0, %s160
    %s178 = sphi 0, %s178
    %s180 = sphi 0, %s178
    %s181 = sphi 0, %s180
    %s195 = sphi 0, %s181
    %s199 = sphi 0, %s199
    %s201 = sphi 0, %s199
    %s202 = sphi 0, %s201
    %s216 = sphi 0, %s202
    %s220 = sphi 0, %s220
    %s222 = sphi 0, %s220
    %s223 = sphi 0, %s222
    %s237 = sphi 0, %s223
    %s241 = sphi 0, %s241
    %s243 = sphi 0, %s241
    %s244 = sphi 0, %s243
    %s258 = sphi 0, %s244
    %s262 = sphi 0, %s262
    %s264 = sphi 0, %s262
    %s265 = sphi 0, %s264
    %s279 = sphi 0, %s265
    %s285 = sphi 0, %s287
    %s288 = sphi 0, %s285
    %s289 = sphi 0, %s288
    %s305 = sphi 0, %s289
  $region4: #{_forward_impl.1} parent=0 // loop_header_branch
    %21 = sbr.rel (%p19) target = $region8
  $region5: #{_forward_impl.1} parent=0 // loop_body
    %s23 = ssub.s32 %s18, 1
    %s24 = ssub.s32 %s18, 2
    %s25 = sadd.s32 %s18, 1
    %s26 = ssub.s32 %s18, %s25
    %p27 = scmp.eq.s32.totalorder %s26, 0
    %s29 = sadd.s32 %s28, 1
    %s30 = scalar_select %p27, %s28, %s29
    %p33 = pneg %p27
    %p34 = scmp.eq.s32.totalorder %s18, 1
    %p35 = por %p33, %p34
    %p36 = scmp.ne.s32.totalorder %s28, %s31
    %p37 = scmp.eq.s32.totalorder %s18, 0
    %p38 = por %p36, %p37
    %p39 = scmp.ne.s32.totalorder %s28, %s31
    %p40 = scmp.eq.s32.totalorder %s23, 1
    %p41 = por %p39, %p40
    %p42 = scmp.ne.s32.totalorder %s31, %s32
    %p43 = scmp.eq.s32.totalorder %s23, 0
    %p44 = por %p42, %p43
    %p45 = scmp.ne.s32.totalorder %s31, %s32
    %p46 = scmp.eq.s32.totalorder %s24, 1
    %p47 = por %p45, %p46
    %p49 = scmp.ne.s32.totalorder %s32, %s48
    %p50 = scmp.eq.s32.totalorder %s24, 0
    %p51 = por %p49, %p50
    %s53 = sadd.s32 %s52, 1
    %p56 = scmp.eq.s32.totalorder %s18, 1
    %p57 = scmp.ne.s32.totalorder %s52, %s54
    %p58 = scmp.eq.s32.totalorder %s18, 0
    %p59 = por %p57, %p58
    %p60 = scmp.ne.s32.totalorder %s52, %s54
    %p61 = scmp.eq.s32.totalorder %s23, 1
    %p62 = por %p60, %p61
    %p63 = scmp.ne.s32.totalorder %s54, %s55
    %p64 = scmp.eq.s32.totalorder %s23, 0
    %p65 = por %p63, %p64
    %p66 = scmp.ne.s32.totalorder %s54, %s55
    %p67 = scmp.eq.s32.totalorder %s24, 1
    %p68 = por %p66, %p67
    %p70 = scmp.ne.s32.totalorder %s55, %s69
    %p71 = scmp.eq.s32.totalorder %s24, 0
    %p72 = por %p70, %p71
    %s74 = sadd.s32 %s73, 1
    %p77 = scmp.eq.s32.totalorder %s18, 1
    %p78 = scmp.ne.s32.totalorder %s73, %s75
    %p79 = scmp.eq.s32.totalorder %s18, 0
    %p80 = por %p78, %p79
    %p81 = scmp.ne.s32.totalorder %s73, %s75
    %p82 = scmp.eq.s32.totalorder %s23, 1
    %p83 = por %p81, %p82
    %p84 = scmp.ne.s32.totalorder %s75, %s76
    %p85 = scmp.eq.s32.totalorder %s23, 0
    %p86 = por %p84, %p85
    %p87 = scmp.ne.s32.totalorder %s75, %s76
    %p88 = scmp.eq.s32.totalorder %s24, 1
    %p89 = por %p87, %p88
    %p91 = scmp.ne.s32.totalorder %s76, %s90
    %p92 = scmp.eq.s32.totalorder %s24, 0
    %p93 = por %p91, %p92
    %s95 = sadd.s32 %s94, 1
    %p98 = scmp.eq.s32.totalorder %s18, 1
    %p99 = scmp.ne.s32.totalorder %s94, %s96
    %p100 = scmp.eq.s32.totalorder %s18, 0
    %p101 = por %p99, %p100
    %p102 = scmp.ne.s32.totalorder %s94, %s96
    %p103 = scmp.eq.s32.totalorder %s23, 1
    %p104 = por %p102, %p103
    %p105 = scmp.ne.s32.totalorder %s96, %s97
    %p106 = scmp.eq.s32.totalorder %s23, 0
    %p107 = por %p105, %p106
    %p108 = scmp.ne.s32.totalorder %s96, %s97
    %p109 = scmp.eq.s32.totalorder %s24, 1
    %p110 = por %p108, %p109
    %p112 = scmp.ne.s32.totalorder %s97, %s111
    %p113 = scmp.eq.s32.totalorder %s24, 0
    %p114 = por %p112, %p113
    %s116 = sadd.s32 %s115, 1
    %p119 = scmp.eq.s32.totalorder %s18, 1
    %p120 = scmp.ne.s32.totalorder %s115, %s117
    %p121 = scmp.eq.s32.totalorder %s18, 0
    %p122 = por %p120, %p121
    %p123 = scmp.ne.s32.totalorder %s115, %s117
    %p124 = scmp.eq.s32.totalorder %s23, 1
    %p125 = por %p123, %p124
    %p126 = scmp.ne.s32.totalorder %s117, %s118
    %p127 = scmp.eq.s32.totalorder %s23, 0
    %p128 = por %p126, %p127
    %p129 = scmp.ne.s32.totalorder %s117, %s118
    %p130 = scmp.eq.s32.totalorder %s24, 1
    %p131 = por %p129, %p130
    %p133 = scmp.ne.s32.totalorder %s118, %s132
    %p134 = scmp.eq.s32.totalorder %s24, 0
    %p135 = por %p133, %p134
    %s137 = sadd.s32 %s136, 1
    %p140 = scmp.eq.s32.totalorder %s18, 1
    %p141 = scmp.ne.s32.totalorder %s136, %s138
    %p142 = scmp.eq.s32.totalorder %s18, 0
    %p143 = por %p141, %p142
    %p144 = scmp.ne.s32.totalorder %s136, %s138
    %p145 = scmp.eq.s32.totalorder %s23, 1
    %p146 = por %p144, %p145
    %p147 = scmp.ne.s32.totalorder %s138, %s139
    %p148 = scmp.eq.s32.totalorder %s23, 0
    %p149 = por %p147, %p148
    %p150 = scmp.ne.s32.totalorder %s138, %s139
    %p151 = scmp.eq.s32.totalorder %s24, 1
    %p152 = por %p150, %p151
    %p154 = scmp.ne.s32.totalorder %s139, %s153
    %p155 = scmp.eq.s32.totalorder %s24, 0
    %p156 = por %p154, %p155
    %s158 = sadd.s32 %s157, 1
    %p161 = scmp.eq.s32.totalorder %s18, 1
    %p162 = scmp.ne.s32.totalorder %s157, %s159
    %p163 = scmp.eq.s32.totalorder %s18, 0
    %p164 = por %p162, %p163
    %p165 = scmp.ne.s32.totalorder %s157, %s159
    %p166 = scmp.eq.s32.totalorder %s23, 1
    %p167 = por %p165, %p166
    %p168 = scmp.ne.s32.totalorder %s159, %s160
    %p169 = scmp.eq.s32.totalorder %s23, 0
    %p170 = por %p168, %p169
    %p171 = scmp.ne.s32.totalorder %s159, %s160
    %p172 = scmp.eq.s32.totalorder %s24, 1
    %p173 = por %p171, %p172
    %p175 = scmp.ne.s32.totalorder %s160, %s174
    %p176 = scmp.eq.s32.totalorder %s24, 0
    %p177 = por %p175, %p176
    %s179 = sadd.s32 %s178, 1
    %p182 = scmp.eq.s32.totalorder %s18, 1
    %p183 = scmp.ne.s32.totalorder %s178, %s180
    %p184 = scmp.eq.s32.totalorder %s18, 0
    %p185 = por %p183, %p184
    %p186 = scmp.ne.s32.totalorder %s178, %s180
    %p187 = scmp.eq.s32.totalorder %s23, 1
    %p188 = por %p186, %p187
    %p189 = scmp.ne.s32.totalorder %s180, %s181
    %p190 = scmp.eq.s32.totalorder %s23, 0
    %p191 = por %p189, %p190
    %p192 = scmp.ne.s32.totalorder %s180, %s181
    %p193 = scmp.eq.s32.totalorder %s24, 1
    %p194 = por %p192, %p193
    %p196 = scmp.ne.s32.totalorder %s181, %s195
    %p197 = scmp.eq.s32.totalorder %s24, 0
    %p198 = por %p196, %p197
    %s200 = sadd.s32 %s199, 1
    %p203 = scmp.eq.s32.totalorder %s18, 1
    %p204 = scmp.ne.s32.totalorder %s199, %s201
    %p205 = scmp.eq.s32.totalorder %s18, 0
    %p206 = por %p204, %p205
    %p207 = scmp.ne.s32.totalorder %s199, %s201
    %p208 = scmp.eq.s32.totalorder %s23, 1
    %p209 = por %p207, %p208
    %p210 = scmp.ne.s32.totalorder %s201, %s202
    %p211 = scmp.eq.s32.totalorder %s23, 0
    %p212 = por %p210, %p211
    %p213 = scmp.ne.s32.totalorder %s201, %s202
    %p214 = scmp.eq.s32.totalorder %s24, 1
    %p215 = por %p213, %p214
    %p217 = scmp.ne.s32.totalorder %s202, %s216
    %p218 = scmp.eq.s32.totalorder %s24, 0
    %p219 = por %p217, %p218
    %s221 = sadd.s32 %s220, 1
    %p224 = scmp.eq.s32.totalorder %s18, 1
    %p225 = scmp.ne.s32.totalorder %s220, %s222
    %p226 = scmp.eq.s32.totalorder %s18, 0
    %p227 = por %p225, %p226
    %p228 = scmp.ne.s32.totalorder %s220, %s222
    %p229 = scmp.eq.s32.totalorder %s23, 1
    %p230 = por %p228, %p229
    %p231 = scmp.ne.s32.totalorder %s222, %s223
    %p232 = scmp.eq.s32.totalorder %s23, 0
    %p233 = por %p231, %p232
    %p234 = scmp.ne.s32.totalorder %s222, %s223
    %p235 = scmp.eq.s32.totalorder %s24, 1
    %p236 = por %p234, %p235
    %p238 = scmp.ne.s32.totalorder %s223, %s237
    %p239 = scmp.eq.s32.totalorder %s24, 0
    %p240 = por %p238, %p239
    %s242 = sadd.s32 %s241, 1
    %p245 = scmp.eq.s32.totalorder %s18, 1
    %p246 = scmp.ne.s32.totalorder %s241, %s243
    %p247 = scmp.eq.s32.totalorder %s18, 0
    %p248 = por %p246, %p247
    %p249 = scmp.ne.s32.totalorder %s241, %s243
    %p250 = scmp.eq.s32.totalorder %s23, 1
    %p251 = por %p249, %p250
    %p252 = scmp.ne.s32.totalorder %s243, %s244
    %p253 = scmp.eq.s32.totalorder %s23, 0
    %p254 = por %p252, %p253
    %p255 = scmp.ne.s32.totalorder %s243, %s244
    %p256 = scmp.eq.s32.totalorder %s24, 1
    %p257 = por %p255, %p256
    %p259 = scmp.ne.s32.totalorder %s244, %s258
    %p260 = scmp.eq.s32.totalorder %s24, 0
    %p261 = por %p259, %p260
    %s263 = sadd.s32 %s262, 1
    %p266 = scmp.eq.s32.totalorder %s18, 1
    %p267 = scmp.ne.s32.totalorder %s262, %s264
    %p268 = scmp.eq.s32.totalorder %s18, 0
    %p269 = por %p267, %p268
    %p270 = scmp.ne.s32.totalorder %s262, %s264
    %p271 = scmp.eq.s32.totalorder %s23, 1
    %p272 = por %p270, %p271
    %p273 = scmp.ne.s32.totalorder %s264, %s265
    %p274 = scmp.eq.s32.totalorder %s23, 0
    %p275 = por %p273, %p274
    %p276 = scmp.ne.s32.totalorder %s264, %s265
    %p277 = scmp.eq.s32.totalorder %s24, 1
    %p278 = por %p276, %p277
    %p280 = scmp.ne.s32.totalorder %s265, %s279
    %p281 = scmp.eq.s32.totalorder %s24, 0
    %p282 = por %p280, %p281
    %s283 = ssub.s32 %s18, %s25
    %p284 = scmp.eq.s32.totalorder %s283, 0
    %s286 = sadd.s32 %s285, 1
    %s287 = scalar_select %p284, %s285, %s286
    %p290 = pneg %p284
    %p291 = scmp.eq.s32.totalorder %s18, 1
    %p292 = por %p290, %p291
    %p293 = scmp.ne.s32.totalorder %s285, %s288
    %p294 = scmp.eq.s32.totalorder %s18, 0
    %p295 = por %p293, %p294
    %p296 = scmp.ne.s32.totalorder %s285, %s288
    %p297 = scmp.eq.s32.totalorder %s23, 1
    %p298 = por %p296, %p297
    %p299 = scmp.ne.s32.totalorder %s288, %s289
    %p300 = scmp.eq.s32.totalorder %s23, 0
    %p301 = por %p299, %p300
    %p302 = scmp.ne.s32.totalorder %s288, %s289
    %p303 = scmp.eq.s32.totalorder %s24, 1
    %p304 = por %p302, %p303
    %p306 = scmp.ne.s32.totalorder %s289, %s305
    %p307 = scmp.eq.s32.totalorder %s24, 0
    %p308 = por %p306, %p307
    %p309 = scmp.le.s32.totalorder 1, %s18
    %p310 = scmp.lt.s32.totalorder %s18, 3
    %p311 = pnand %p309, %p310
    %p312 = pneg %p311
    // Predicated region
    $region9: #{_forward_impl.1} parent=5 // pred_check
      _
    $region10: #{_forward_impl.1} parent=5 // pred_check_branch
      %314 = sbr.rel (%p311) target = $region12
    $region11: #{_forward_impl.1} parent=5 // pred_region
      %s315 = ssub.s32 %s18, 1
      // Predicated region
      $region13: #{_forward_impl.1} parent=11 // pred_check
        %p316 = pneg %p65
      $region14: #{_forward_impl.1} parent=11 // pred_check_branch
        %318 = sbr.rel (%p316) target = $region16
      $region15: #{_forward_impl.1} parent=11 // pred_region
        _
      $region16: #{_forward_impl.1} parent=11 // pred_fallthru
        _
      // Predicated region
      $region17: #{_forward_impl.1} parent=11 // pred_check
        %p319 = pneg %p86
      $region18: #{_forward_impl.1} parent=11 // pred_check_branch
        %321 = sbr.rel (%p319) target = $region20
      $region19: #{_forward_impl.1} parent=11 // pred_region
        _
      $region20: #{_forward_impl.1} parent=11 // pred_fallthru
        _
      // Predicated region
      $region21: #{_forward_impl.1} parent=11 // pred_check
        %p322 = pneg %p107
      $region22: #{_forward_impl.1} parent=11 // pred_check_branch
        %324 = sbr.rel (%p322) target = $region24
      $region23: #{_forward_impl.1} parent=11 // pred_region
        _
      $region24: #{_forward_impl.1} parent=11 // pred_fallthru
        _
      // Predicated region
      $region25: #{_forward_impl.1} parent=11 // pred_check
        %p325 = pneg %p128
      $region26: #{_forward_impl.1} parent=11 // pred_check_branch
        %327 = sbr.rel (%p325) target = $region28
      $region27: #{_forward_impl.1} parent=11 // pred_region
        _
      $region28: #{_forward_impl.1} parent=11 // pred_fallthru
        _
      // Predicated region
      $region29: #{_forward_impl.1} parent=11 // pred_check
        %p328 = pneg %p149
      $region30: #{_forward_impl.1} parent=11 // pred_check_branch
        %330 = sbr.rel (%p328) target = $region32
      $region31: #{_forward_impl.1} parent=11 // pred_region
        _
      $region32: #{_forward_impl.1} parent=11 // pred_fallthru
        _
      // Predicated region
      $region33: #{_forward_impl.1} parent=11 // pred_check
        %p331 = pneg %p170
      $region34: #{_forward_impl.1} parent=11 // pred_check_branch
        %333 = sbr.rel (%p331) target = $region36
      $region35: #{_forward_impl.1} parent=11 // pred_region
        _
      $region36: #{_forward_impl.1} parent=11 // pred_fallthru
        _
      // Predicated region
      $region37: #{_forward_impl.1} parent=11 // pred_check
        %p334 = pneg %p191
      $region38: #{_forward_impl.1} parent=11 // pred_check_branch
        %336 = sbr.rel (%p334) target = $region40
      $region39: #{_forward_impl.1} parent=11 // pred_region
        _
      $region40: #{_forward_impl.1} parent=11 // pred_fallthru
        _
      // Predicated region
      $region41: #{_forward_impl.1} parent=11 // pred_check
        %p337 = pneg %p212
      $region42: #{_forward_impl.1} parent=11 // pred_check_branch
        %339 = sbr.rel (%p337) target = $region44
      $region43: #{_forward_impl.1} parent=11 // pred_region
        _
      $region44: #{_forward_impl.1} parent=11 // pred_fallthru
        _
      // Predicated region
      $region45: #{_forward_impl.1} parent=11 // pred_check
        %p340 = pneg %p233
      $region46: #{_forward_impl.1} parent=11 // pred_check_branch
        %342 = sbr.rel (%p340) target = $region48
      $region47: #{_forward_impl.1} parent=11 // pred_region
        _
      $region48: #{_forward_impl.1} parent=11 // pred_fallthru
        _
      // Predicated region
      $region49: #{_forward_impl.1} parent=11 // pred_check
        %p343 = pneg %p254
      $region50: #{_forward_impl.1} parent=11 // pred_check_branch
        %345 = sbr.rel (%p343) target = $region52
      $region51: #{_forward_impl.1} parent=11 // pred_region
        _
      $region52: #{_forward_impl.1} parent=11 // pred_fallthru
        _
      // Predicated region
      $region53: #{_forward_impl.1} parent=11 // pred_check
        %p346 = pneg %p275
      $region54: #{_forward_impl.1} parent=11 // pred_check_branch
        %348 = sbr.rel (%p346) target = $region56
      $region55: #{_forward_impl.1} parent=11 // pred_region
        _
      $region56: #{_forward_impl.1} parent=11 // pred_fallthru
        _
    $region12: #{_forward_impl.1} parent=5 // pred_fallthru
      _
    %p349 = scmp.lt.s32.totalorder %s18, 2
    // Predicated region
    $region57: #{_forward_impl.1} parent=5 // pred_check
      %p350 = pneg %p349
    $region58: #{_forward_impl.1} parent=5 // pred_check_branch
      %352 = sbr.rel (%p350) target = $region60
    $region59: #{_forward_impl.1} parent=5 // pred_region
      // Predicated region
      $region61: #{_forward_impl.1} parent=59 // pred_check
        %p353 = pneg %p38
      $region62: #{_forward_impl.1} parent=59 // pred_check_branch
        %355 = sbr.rel (%p353) target = $region64
      $region63: #{_forward_impl.1} parent=59 // pred_region
        %s356 = smul.u32 2, %s18
        %p357 = scmp.lt.s32.totalorder %s356, 3
        %s358 = scalar_select %p357, %s356, 3
        %s359 = smul.addr %s358, 2
        %s360 = smul.addr %s359, 8
        %s361 = scalar_lea.vmem %s0, %s360
        %s362 = smul.u32 2, %s18
      $region64: #{_forward_impl.1} parent=59 // pred_fallthru
        _
    $region60: #{_forward_impl.1} parent=5 // pred_fallthru
      _
    %p363 = scmp.le.s32.totalorder 1, %s18
    %p364 = scmp.lt.s32.totalorder %s18, 3
    %p365 = pnand %p363, %p364
    %p366 = pneg %p365
    // Predicated region
    $region65: #{_forward_impl.1} parent=5 // pred_check
      _
    $region66: #{_forward_impl.1} parent=5 // pred_check_branch
      %368 = sbr.rel (%p365) target = $region68
    $region67: #{_forward_impl.1} parent=5 // pred_region
      %s369 = ssub.s32 %s18, 1
      %s370 = smul.u32 2, %s23
      %p371 = scmp.lt.s32.totalorder %s370, 3
      %s372 = scalar_select %p371, %s370, 3
      %s373 = smul.addr %s372, 2
      %s374 = smul.addr %s373, 8
      %s375 = scalar_lea.vmem %s0, %s374
      %p376 = pneg %p44
      %p377 = pneg %p41
      %p378 = pneg %p65
      %p379 = pneg %p62
      %p380 = pneg %p86
      %p381 = pneg %p83
      %p382 = pneg %p107
      %p383 = pneg %p104
      %p384 = pneg %p128
      %p385 = pneg %p125
      %p386 = pneg %p149
      %p387 = pneg %p146
      %p388 = pneg %p170
      %p389 = pneg %p167
      %p390 = pneg %p191
      %p391 = pneg %p188
      %p392 = pneg %p212
      %p393 = pneg %p209
      %p394 = pneg %p233
      %p395 = pneg %p230
      %p396 = pneg %p254
      %p397 = pneg %p251
      %p398 = pneg %p275
      %p399 = pneg %p272
      %p400 = pneg %p301
      %p401 = pneg %p298
      %s402 = smul.u32 2, %s23
      %p403 = scmp.lt.s32.totalorder %s402, 3
      %s404 = scalar_select %p403, %s402, 3
      %s405 = smul.addr %s404, 2
      %s406 = smul.addr %s405, 4
      %s407 = scalar_lea.vmem %s12, %s406
      %s408 = smul.u32 2, %s23
      %p409 = scmp.lt.s32.totalorder %s408, 3
      %s410 = scalar_select %p409, %s408, 3
      %s411 = smul.addr %s410, 2
      %s412 = smul.addr %s411, 8
      %s413 = scalar_lea.vmem %s0, %s412
      %s414 = smul.u32 2, %s23
      %s415 = smul.u32 2, %s23
      %p416 = scmp.lt.s32.totalorder %s415, 3
      %s417 = scalar_select %p416, %s415, 3
      %s418 = smul.addr %s417, 2
      %s419 = smul.addr %s418, 4
      %s420 = scalar_lea.vmem %s12, %s419
      %s421 = smul.u32 2, %s23
      %v423 = vld [vmem:[%s413] sm:$0xff]
      %v424 = vld [vmem:[%s413 + $0x8] sm:$0xff]
      %v425 = vld [vmem:[%s413 + $0x10] sm:$0xff]
      %v426 = vld [vmem:[%s413 + $0x18] sm:$0xff]
      %v427 = vpack.c.bf16 %v425, %v423
      %v428 = vpack.c.bf16 %v426, %v424
      %v429 = vld [vmem:[%s1] sm:$0xf]
      %v430 = vld [vmem:[%s1 + $0x4] sm:$0xf]
      %v431 = vld [vmem:[%s1 + $0x8] sm:$0xf]
      %v432 = vld [vmem:[%s1 + $0xc] sm:$0xf]
      %v433 = vld [vmem:[%s1 + $0x10] sm:$0xf]
      %v434 = vld [vmem:[%s1 + $0x14] sm:$0xf]
      %v435 = vld [vmem:[%s1 + $0x18] sm:$0xf]
      %v436 = vld [vmem:[%s1 + $0x1c] sm:$0xf]
      %v437 = vld [vmem:[%s1 + $0x20] sm:$0xf]
      %v438 = vld [vmem:[%s1 + $0x24] sm:$0xf]
      %v439 = vld [vmem:[%s1 + $0x28] sm:$0xf]
      %v440 = vld [vmem:[%s1 + $0x2c] sm:$0xf]
      %v441 = vld [vmem:[%s1 + $0x30] sm:$0xf]
      %v442 = vld [vmem:[%s1 + $0x34] sm:$0xf]
      %v443 = vld [vmem:[%s1 + $0x38] sm:$0xf]
      %v444 = vld [vmem:[%s1 + $0x3c] sm:$0xf]
      %v445 = vld [vmem:[%s1 + $0x40] sm:$0xf]
      %v446 = vld [vmem:[%s1 + $0x44] sm:$0xf]
      %v447 = vld [vmem:[%s1 + $0x48] sm:$0xf]
      %v448 = vld [vmem:[%s1 + $0x4c] sm:$0xf]
      %v449 = vld [vmem:[%s1 + $0x50] sm:$0xf]
      %v450 = vld [vmem:[%s1 + $0x54] sm:$0xf]
      %v451 = vld [vmem:[%s1 + $0x58] sm:$0xf]
      %v452 = vld [vmem:[%s1 + $0x5c] sm:$0xf]
      %v453 = vld [vmem:[%s1 + $0x60] sm:$0xf]
      %v454 = vld [vmem:[%s1 + $0x64] sm:$0xf]
      %v455 = vld [vmem:[%s1 + $0x68] sm:$0xf]
      %v456 = vld [vmem:[%s1 + $0x6c] sm:$0xf]
      %v457 = vld [vmem:[%s1 + $0x70] sm:$0xf]
      %v458 = vld [vmem:[%s1 + $0x74] sm:$0xf]
      %v459 = vld [vmem:[%s1 + $0x78] sm:$0xf]
      %v460 = vld [vmem:[%s1 + $0x7c] sm:$0xf]
      %v493 = vunpack.c.l.b16 %v429
      %v494 = vunpack.c.l.b16 %v430
      %v495 = vunpack.c.l.b16 %v431
      %v496 = vunpack.c.l.b16 %v432
      %v497 = vunpack.c.l.b16 %v433
      %v498 = vunpack.c.l.b16 %v434
      %v499 = vunpack.c.l.b16 %v435
      %v500 = vunpack.c.l.b16 %v436
      %v501 = vunpack.c.l.b16 %v437
      %v502 = vunpack.c.l.b16 %v438
      %v503 = vunpack.c.l.b16 %v439
      %v504 = vunpack.c.l.b16 %v440
      %v505 = vunpack.c.l.b16 %v441
      %v506 = vunpack.c.l.b16 %v442
      %v507 = vunpack.c.l.b16 %v443
      %v508 = vunpack.c.l.b16 %v444
      %v509 = vunpack.c.l.b16 %v445
      %v510 = vunpack.c.l.b16 %v446
      %v511 = vunpack.c.l.b16 %v447
      %v512 = vunpack.c.l.b16 %v448
      %v513 = vunpack.c.l.b16 %v449
      %v514 = vunpack.c.l.b16 %v450
      %v515 = vunpack.c.l.b16 %v451
      %v516 = vunpack.c.l.b16 %v452
      %v517 = vunpack.c.l.b16 %v453
      %v518 = vunpack.c.l.b16 %v454
      %v519 = vunpack.c.l.b16 %v455
      %v520 = vunpack.c.l.b16 %v456
      %v521 = vunpack.c.l.b16 %v457
      %v522 = vunpack.c.l.b16 %v458
      %v523 = vunpack.c.l.b16 %v459
      %v524 = vunpack.c.l.b16 %v460
      %v525 = vpack.c.b16 %v494, %v493
      %v526 = vpack.c.b16 %v496, %v495
      %v527 = vpack.c.b16 %v498, %v497
      %v528 = vpack.c.b16 %v500, %v499
      %v529 = vpack.c.b16 %v502, %v501
      %v530 = vpack.c.b16 %v504, %v503
      %v531 = vpack.c.b16 %v506, %v505
      %v532 = vpack.c.b16 %v508, %v507
      %v533 = vpack.c.b16 %v510, %v509
      %v534 = vpack.c.b16 %v512, %v511
      %v535 = vpack.c.b16 %v514, %v513
      %v536 = vpack.c.b16 %v516, %v515
      %v537 = vpack.c.b16 %v518, %v517
      %v538 = vpack.c.b16 %v520, %v519
      %v539 = vpack.c.b16 %v522, %v521
      %v540 = vpack.c.b16 %v524, %v523
      %557 = vmatpush.bf16.msra.mxu0 %v532
      %558 = vmatpush.bf16.msra.mxu0 %v531
      %559 = vmatpush.bf16.msra.mxu0 %v530
      %560 = vmatpush.bf16.msra.mxu0 %v529
      %561 = vmatpush.bf16.msra.mxu0 %v528
      %562 = vmatpush.bf16.msra.mxu0 %v527
      %563 = vmatpush.bf16.msra.mxu0 %v526
      %564 = vmatpush.bf16.msra.mxu0 %v525
      %565 = vmatmul.bf16.gmra.mxu0 %v427
      %v566 = vpop.f32.mrf.mxu0
      %v567 = vadd.f32 0.0, %v566
      %v568 = vpop.f32.mrf.mxu0
      %v569 = vadd.f32 0.0, %v568
      %570 = vdwg.mxu0
      %571 = vmatpush.bf16.msra.mxu0 %v540
      %572 = vmatpush.bf16.msra.mxu0 %v539
      %573 = vmatpush.bf16.msra.mxu0 %v538
      %574 = vmatpush.bf16.msra.mxu0 %v537
      %575 = vmatpush.bf16.msra.mxu0 %v536
      %576 = vmatpush.bf16.msra.mxu0 %v535
      %577 = vmatpush.bf16.msra.mxu0 %v534
      %578 = vmatpush.bf16.msra.mxu0 %v533
      %579 = vmatmul.bf16.gmra.mxu0 %v428
      %v580 = vpop.f32.mrf.mxu0
      %v581 = vadd.f32 %v567, %v580
      %v582 = vpop.f32.mrf.mxu0
      %v583 = vadd.f32 %v569, %v582
      %584 = vdwg.mxu0
      %v585 = vld [vmem:[%s2] sm:$0xf]
      %v586 = vld [vmem:[%s2 + $0x4] sm:$0xf]
      %v587 = vpack.c.bf16 %v583, %v581
      %v588 = vld [vmem:[%s3] sm:$0xff]
      %v589 = vld [vmem:[%s3 + $0x8] sm:$0xff]
      %591 = vset.pattern.permute.xlu0 0
      %592 = vperm.xlu0 %591, %v588
      %v593 = vpop.permute.xlu0 %592
      %596 = vset.pattern.permute.xlu0 0
      %597 = vperm.xlu0 %596, %v589
      %v598 = vpop.permute.xlu0 %597
      %v602 = vunpack.c.l.b16 %v585
      %v603 = vunpack.c.l.b16 %v586
      %v604 = vpack.c.b16 %v603, %v602
      %vm605 = vcmask 130048
      %v607 = vsel %vm605, %v604, 0
      %609 = vmatpush.bf16.msra.mxu0 0
      %610 = vmatpush.bf16.msra.mxu0 0
      %611 = vmatpush.bf16.msra.mxu0 0
      %612 = vmatpush.bf16.msra.mxu0 0
      %613 = vmatpush.bf16.msra.mxu0 0
      %614 = vmatpush.bf16.msra.mxu0 0
      %615 = vmatpush.bf16.msra.mxu0 0
      %616 = vmatpush.bf16.msra.mxu0 %v587
      %617 = vmatmul.bf16.gmra.mxu0 %v607
      %v618 = vpop.f32.mrf.mxu0
      %v619 = vadd.f32 %v593, %v618
      %v620 = vpop.f32.mrf.mxu0
      %v621 = vadd.f32 %v598, %v620
      %622 = vdwg.mxu0
      %v623 = vmax.f32 %v619, 0.0
      %v624 = vmax.f32 %v621, 0.0
      %v625 = vmin.f32 %v623, 6.0
      %v626 = vmin.f32 %v624, 6.0
      %v627 = vmul.f32 %v625, %v626
      %v628 = vpack.c.bf16 %v627, %v627
      %v629 = vld [vmem:[%s4] sm:$0xff]
      %v630 = vld [vmem:[%s4 + $0x8] sm:$0xff]
      %v631 = vld [vmem:[%s4 + $0x10] sm:$0xff]
      %v632 = vld [vmem:[%s4 + $0x18] sm:$0xff]
      %v633 = vld [vmem:[%s4 + $0x20] sm:$0xff]
      %v634 = vld [vmem:[%s4 + $0x28] sm:$0xff]
      %v635 = vld [vmem:[%s4 + $0x30] sm:$0xff]
      %v636 = vld [vmem:[%s4 + $0x38] sm:$0xff]
      %v645 = vunpack.c.l.b16 %v629
      %v646 = vunpack.c.h.b16 %v629
      %v647 = vunpack.c.l.b16 %v630
      %v648 = vunpack.c.h.b16 %v630
      %v649 = vunpack.c.l.b16 %v631
      %v650 = vunpack.c.h.b16 %v631
      %v651 = vunpack.c.l.b16 %v632
      %v652 = vunpack.c.h.b16 %v632
      %v653 = vunpack.c.l.b16 %v633
      %v654 = vunpack.c.h.b16 %v633
      %v655 = vunpack.c.l.b16 %v634
      %v656 = vunpack.c.h.b16 %v634
      %v657 = vunpack.c.l.b16 %v635
      %v658 = vunpack.c.h.b16 %v635
      %v659 = vunpack.c.l.b16 %v636
      %v660 = vunpack.c.h.b16 %v636
      %v661 = vpack.c.b16 %v647, %v645
      %v662 = vpack.c.b16 %v648, %v646
      %v663 = vpack.c.b16 %v651, %v649
      %v664 = vpack.c.b16 %v652, %v650
      %v665 = vpack.c.b16 %v655, %v653
      %v666 = vpack.c.b16 %v656, %v654
      %v667 = vpack.c.b16 %v659, %v657
      %v668 = vpack.c.b16 %v660, %v658
      %vm677 = vcmask 523264
      %v679 = vsel %vm677, %v628, 0
      %681 = vmatpush.bf16.msra.mxu0 0
      %682 = vmatpush.bf16.msra.mxu0 0
      %683 = vmatpush.bf16.msra.mxu0 0
      %684 = vmatpush.bf16.msra.mxu0 0
      %685 = vmatpush.bf16.msra.mxu0 %v667
      %686 = vmatpush.bf16.msra.mxu0 %v665
      %687 = vmatpush.bf16.msra.mxu0 %v663
      %688 = vmatpush.bf16.msra.mxu0 %v661
      %689 = vmatmul.bf16.gmra.mxu0 %v679
      %v690 = vpop.f32.mrf.mxu0
      %v691 = vadd.f32 0.0, %v690
      %v692 = vpop.f32.mrf.mxu0
      %693 = vdwg.mxu0
      %694 = vmatpush.bf16.msra.mxu0 0
      %695 = vmatpush.bf16.msra.mxu0 0
      %696 = vmatpush.bf16.msra.mxu0 0
      %697 = vmatpush.bf16.msra.mxu0 0
      %698 = vmatpush.bf16.msra.mxu0 %v668
      %699 = vmatpush.bf16.msra.mxu0 %v666
      %700 = vmatpush.bf16.msra.mxu0 %v664
      %701 = vmatpush.bf16.msra.mxu0 %v662
      %702 = vmatmul.bf16.gmra.mxu0 %v679
      %v703 = vpop.f32.mrf.mxu0
      %v704 = vadd.f32 0.0, %v703
      %v705 = vpop.f32.mrf.mxu0
      %706 = vdwg.mxu0
      %v707 = vld [vmem:[%s5] sm:$0xf]
      %v708 = vpack.c.bf16 %v691, %v691
      %v709 = vpack.c.bf16 %v704, %v704
      %v710 = vld [vmem:[%s6] sm:$0xff]
      %712 = vset.pattern.permute.xlu0 0
      %713 = vperm.xlu0 %712, %v710
      %v714 = vpop.permute.xlu0 %713
      %vm716 = vcmask 64512
      %v718 = vsel %vm716, %v707, 0
      %vm720 = vcmask 1043456
      %v722 = vsel %vm720, %v708, 0
      %v725 = vsel %vm720, %v709, 0
      %727 = vmatpush.bf16.msra.mxu0 0
      %728 = vmatpush.bf16.msra.mxu0 0
      %729 = vmatpush.bf16.msra.mxu0 0
      %730 = vmatpush.bf16.msra.mxu0 0
      %731 = vmatpush.bf16.msra.mxu0 0
      %732 = vmatpush.bf16.msra.mxu0 0
      %733 = vmatpush.bf16.msra.mxu0 0
      %734 = vmatpush.bf16.msra.mxu0 %v722
      %735 = vmatmul.bf16.gmra.mxu0 %v718
      %v736 = vpop.f32.mrf.mxu0
      %v737 = vadd.f32 %v714, %v736
      %v738 = vpop.f32.mrf.mxu0
      %739 = vdwg.mxu0
      %740 = vmatpush.bf16.msra.mxu0 0
      %741 = vmatpush.bf16.msra.mxu0 0
      %742 = vmatpush.bf16.msra.mxu0 0
      %743 = vmatpush.bf16.msra.mxu0 0
      %744 = vmatpush.bf16.msra.mxu0 0
      %745 = vmatpush.bf16.msra.mxu0 0
      %746 = vmatpush.bf16.msra.mxu0 0
      %747 = vmatpush.bf16.msra.mxu0 %v725
      %748 = vmatmul.bf16.gmra.mxu0 %v718
      %v749 = vpop.f32.mrf.mxu0
      %v750 = vadd.f32 %v714, %v749
      %v751 = vpop.f32.mrf.mxu0
      %752 = vdwg.mxu0
      %v753 = vmax.f32 %v737, 0.0
      %v754 = vmax.f32 %v750, 0.0
      %v755 = vmin.f32 %v753, 6.0
      %v756 = vmin.f32 %v754, 6.0
      %v757 = vld [vmem:[%s7] sm:$0xf]
      %v758 = vld [vmem:[%s7 + $0x4] sm:$0xf]
      %v759 = vld [vmem:[%s7 + $0x8] sm:$0xf]
      %v760 = vld [vmem:[%s7 + $0xc] sm:$0xf]
      %v761 = vld [vmem:[%s7 + $0x10] sm:$0xf]
      %v762 = vld [vmem:[%s7 + $0x14] sm:$0xf]
      %v763 = vld [vmem:[%s7 + $0x18] sm:$0xf]
      %v764 = vld [vmem:[%s7 + $0x1c] sm:$0xf]
      %v765 = vld [vmem:[%s7 + $0x20] sm:$0xf]
      %v766 = vld [vmem:[%s7 + $0x24] sm:$0xf]
      %v767 = vld [vmem:[%s7 + $0x28] sm:$0xf]
      %v768 = vld [vmem:[%s7 + $0x2c] sm:$0xf]
      %v769 = vld [vmem:[%s7 + $0x30] sm:$0xf]
      %v770 = vld [vmem:[%s7 + $0x34] sm:$0xf]
      %v771 = vld [vmem:[%s7 + $0x38] sm:$0xf]
      %v772 = vld [vmem:[%s7 + $0x3c] sm:$0xf]
      %v773 = vld [vmem:[%s7 + $0x40] sm:$0xf]
      %v774 = vld [vmem:[%s7 + $0x44] sm:$0xf]
      %v775 = vpack.c.bf16 %v755, %v755
      %v776 = vpack.c.bf16 %v756, %v756
      %v795 = vunpack.c.l.b16 %v757
      %v796 = vunpack.c.l.b16 %v758
      %v797 = vunpack.c.l.b16 %v759
      %v798 = vunpack.c.l.b16 %v760
      %v799 = vunpack.c.l.b16 %v761
      %v800 = vunpack.c.l.b16 %v762
      %v801 = vunpack.c.l.b16 %v763
      %v802 = vunpack.c.l.b16 %v764
      %v803 = vunpack.c.l.b16 %v765
      %v804 = vunpack.c.l.b16 %v766
      %v805 = vunpack.c.l.b16 %v767
      %v806 = vunpack.c.l.b16 %v768
      %v807 = vunpack.c.l.b16 %v769
      %v808 = vunpack.c.l.b16 %v770
      %v809 = vunpack.c.l.b16 %v771
      %v810 = vunpack.c.l.b16 %v772
      %v811 = vunpack.c.l.b16 %v773
      %v812 = vunpack.c.l.b16 %v774
      %v813 = vpack.c.b16 %v796, %v795
      %v814 = vpack.c.b16 %v798, %v797
      %v815 = vpack.c.b16 %v800, %v799
      %v816 = vpack.c.b16 %v802, %v801
      %v817 = vpack.c.b16 %v804, %v803
      %v818 = vpack.c.b16 %v806, %v805
      %v819 = vpack.c.b16 %v808, %v807
      %v820 = vpack.c.b16 %v810, %v809
      %v821 = vpack.c.b16 %v812, %v811
      %v823 = vsel %vm716, %v813, 0
      %v826 = vsel %vm716, %v814, 0
      %v829 = vsel %vm716, %v815, 0
      %v832 = vsel %vm716, %v816, 0
      %v835 = vsel %vm716, %v817, 0
      %v838 = vsel %vm716, %v818, 0
      %v841 = vsel %vm716, %v819, 0
      %v844 = vsel %vm716, %v820, 0
      %v847 = vsel %vm716, %v821, 0
      %v850 = vsel %vm720, %v775, 0
      %v853 = vsel %vm720, %v776, 0
      %855 = vmatpush.bf16.msra.mxu0 0
      %856 = vmatpush.bf16.msra.mxu0 0
      %857 = vmatpush.bf16.msra.mxu0 0
      %858 = vmatpush.bf16.msra.mxu0 0
      %859 = vmatpush.bf16.msra.mxu0 0
      %860 = vmatpush.bf16.msra.mxu0 0
      %861 = vmatpush.bf16.msra.mxu0 0
      %862 = vmatpush.bf16.msra.mxu0 %v850
      %863 = vmatmul.bf16.gmra.mxu0 %v823
      %v864 = vpop.f32.mrf.mxu0
      %v865 = vadd.f32 0.0, %v864
      %v866 = vpop.f32.mrf.mxu0
      %v867 = vadd.f32 0.0, %v866
      %868 = vmatmul.bf16.gmra.mxu0 %v826
      %v869 = vpop.f32.mrf.mxu0
      %v870 = vadd.f32 0.0, %v869
      %v871 = vpop.f32.mrf.mxu0
      %v872 = vadd.f32 0.0, %v871
      %873 = vmatmul.bf16.gmra.mxu0 %v829
      %v874 = vpop.f32.mrf.mxu0
      %v875 = vadd.f32 0.0, %v874
      %v876 = vpop.f32.mrf.mxu0
      %v877 = vadd.f32 0.0, %v876
      %878 = vmatmul.bf16.gmra.mxu0 %v832
      %v879 = vpop.f32.mrf.mxu0
      %v880 = vadd.f32 0.0, %v879
      %v881 = vpop.f32.mrf.mxu0
      %v882 = vadd.f32 0.0, %v881
      %883 = vmatmul.bf16.gmra.mxu0 %v835
      %v884 = vpop.f32.mrf.mxu0
      %v885 = vadd.f32 0.0, %v884
      %v886 = vpop.f32.mrf.mxu0
      %v887 = vadd.f32 0.0, %v886
      %888 = vmatmul.bf16.gmra.mxu0 %v838
      %v889 = vpop.f32.mrf.mxu0
      %v890 = vadd.f32 0.0, %v889
      %v891 = vpop.f32.mrf.mxu0
      %v892 = vadd.f32 0.0, %v891
      %893 = vmatmul.bf16.gmra.mxu0 %v841
      %v894 = vpop.f32.mrf.mxu0
      %v895 = vadd.f32 0.0, %v894
      %v896 = vpop.f32.mrf.mxu0
      %v897 = vadd.f32 0.0, %v896
      %898 = vmatmul.bf16.gmra.mxu0 %v844
      %v899 = vpop.f32.mrf.mxu0
      %v900 = vadd.f32 0.0, %v899
      %v901 = vpop.f32.mrf.mxu0
      %v902 = vadd.f32 0.0, %v901
      %903 = vmatmul.bf16.gmra.mxu0 %v847
      %v904 = vpop.f32.mrf.mxu0
      %v905 = vadd.f32 0.0, %v904
      %v906 = vpop.f32.mrf.mxu0
      %v907 = vadd.f32 0.0, %v906
      %908 = vdwg.mxu0
      %909 = vmatpush.bf16.msra.mxu0 0
      %910 = vmatpush.bf16.msra.mxu0 0
      %911 = vmatpush.bf16.msra.mxu0 0
      %912 = vmatpush.bf16.msra.mxu0 0
      %913 = vmatpush.bf16.msra.mxu0 0
      %914 = vmatpush.bf16.msra.mxu0 0
      %915 = vmatpush.bf16.msra.mxu0 0
      %916 = vmatpush.bf16.msra.mxu0 %v853
      %917 = vmatmul.bf16.gmra.mxu0 %v823
      %v918 = vpop.f32.mrf.mxu0
      %v919 = vadd.f32 0.0, %v918
      %v920 = vpop.f32.mrf.mxu0
      %v921 = vadd.f32 0.0, %v920
      %922 = vmatmul.bf16.gmra.mxu0 %v826
      %v923 = vpop.f32.mrf.mxu0
      %v924 = vadd.f32 0.0, %v923
      %v925 = vpop.f32.mrf.mxu0
      %v926 = vadd.f32 0.0, %v925
      %927 = vmatmul.bf16.gmra.mxu0 %v829
      %v928 = vpop.f32.mrf.mxu0
      %v929 = vadd.f32 0.0, %v928
      %v930 = vpop.f32.mrf.mxu0
      %v931 = vadd.f32 0.0, %v930
      %932 = vmatmul.bf16.gmra.mxu0 %v832
      %v933 = vpop.f32.mrf.mxu0
      %v934 = vadd.f32 0.0, %v933
      %v935 = vpop.f32.mrf.mxu0
      %v936 = vadd.f32 0.0, %v935
      %937 = vmatmul.bf16.gmra.mxu0 %v835
      %v938 = vpop.f32.mrf.mxu0
      %v939 = vadd.f32 0.0, %v938
      %v940 = vpop.f32.mrf.mxu0
      %v941 = vadd.f32 0.0, %v940
      %942 = vmatmul.bf16.gmra.mxu0 %v838
      %v943 = vpop.f32.mrf.mxu0
      %v944 = vadd.f32 0.0, %v943
      %v945 = vpop.f32.mrf.mxu0
      %v946 = vadd.f32 0.0, %v945
      %947 = vmatmul.bf16.gmra.mxu0 %v841
      %v948 = vpop.f32.mrf.mxu0
      %v949 = vadd.f32 0.0, %v948
      %v950 = vpop.f32.mrf.mxu0
      %v951 = vadd.f32 0.0, %v950
      %952 = vmatmul.bf16.gmra.mxu0 %v844
      %v953 = vpop.f32.mrf.mxu0
      %v954 = vadd.f32 0.0, %v953
      %v955 = vpop.f32.mrf.mxu0
      %v956 = vadd.f32 0.0, %v955
      %957 = vmatmul.bf16.gmra.mxu0 %v847
      %v958 = vpop.f32.mrf.mxu0
      %v959 = vadd.f32 0.0, %v958
      %v960 = vpop.f32.mrf.mxu0
      %v961 = vadd.f32 0.0, %v960
      %962 = vdwg.mxu0
      %963 = vrot.lane.b32.xlu0 %v865, 17
      %v964 = vpop.permute.xlu0 %963
      %965 = vrot.lane.b32.xlu0 %v867, 17
      %v966 = vpop.permute.xlu0 %965
      %967 = vrot.lane.b32.xlu0 %v919, 17
      %v968 = vpop.permute.xlu0 %967
      %969 = vrot.lane.b32.xlu0 %v921, 17
      %v970 = vpop.permute.xlu0 %969
      %v971 = vlaneseq
      %v972 = vand.u32 %v971, 127
      %vm973 = vcmp.lt.s32.totalorder %v972, 17
      %v974 = vsel %vm973, %v964, %v968
      %v975 = vsel %vm973, %v966, %v970
      %v976 = vsel %vm973, %v968, %v964
      %v977 = vsel %vm973, %v970, %v966
      %v978 = vld [vmem:[%s11] sm:$0x3]
      %v980 = vperm.slane %v978, 0
      %v981 = vperm.slane %v978, 1
      %v984 = vmul.f32 %v976, %v980
      %v985 = vmul.f32 %v974, %v981
      %v986 = vmul.f32 %v977, %v980
      %v987 = vmul.f32 %v975, %v981
      %v988 = vadd.f32 %v885, %v984
      %v989 = vadd.f32 %v939, %v985
      %v990 = vadd.f32 %v887, %v986
      %v991 = vadd.f32 %v941, %v987
      %992 = vrot.lane.b32.xlu0 %v870, 16
      %v993 = vpop.permute.xlu0 %992
      %994 = vrot.lane.b32.xlu0 %v872, 16
      %v995 = vpop.permute.xlu0 %994
      %996 = vrot.lane.b32.xlu0 %v924, 16
      %v997 = vpop.permute.xlu0 %996
      %998 = vrot.lane.b32.xlu0 %v926, 16
      %v999 = vpop.permute.xlu0 %998
      %vm1000 = vcmp.lt.s32.totalorder %v972, 16
      %v1001 = vsel %vm1000, %v993, %v997
      %v1002 = vsel %vm1000, %v995, %v999
      %v1003 = vsel %vm1000, %v997, %v993
      %v1004 = vsel %vm1000, %v999, %v995
      %s1005 = scalar_lea.vmem %s11, 2
      %v1006 = vld [vmem:[%s1005] sm:$0x3]
      %v1008 = vperm.slane %v1006, 0
      %v1009 = vperm.slane %v1006, 1
      %v1012 = vmul.f32 %v1003, %v1008
      %v1013 = vmul.f32 %v1001, %v1009
      %v1014 = vmul.f32 %v1004, %v1008
      %v1015 = vmul.f32 %v1002, %v1009
      %v1016 = vadd.f32 %v988, %v1012
      %v1017 = vadd.f32 %v989, %v1013
      %v1018 = vadd.f32 %v990, %v1014
      %v1019 = vadd.f32 %v991, %v1015
      %1020 = vrot.lane.b32.xlu0 %v875, 15
      %v1021 = vpop.permute.xlu0 %1020
      %1022 = vrot.lane.b32.xlu0 %v877, 15
      %v1023 = vpop.permute.xlu0 %1022
      %1024 = vrot.lane.b32.xlu0 %v929, 15
      %v1025 = vpop.permute.xlu0 %1024
      %1026 = vrot.lane.b32.xlu0 %v931, 15
      %v1027 = vpop.permute.xlu0 %1026
      %vm1028 = vcmp.lt.s32.totalorder %v972, 15
      %v1029 = vsel %vm1028, %v1021, %v1025
      %v1030 = vsel %vm1028, %v1023, %v1027
      %v1031 = vsel %vm1028, %v1025, %v1021
      %v1032 = vsel %vm1028, %v1027, %v1023
      %s1033 = scalar_lea.vmem %s11, 4
      %v1034 = vld [vmem:[%s1033] sm:$0x3]
      %v1036 = vperm.slane %v1034, 0
      %v1037 = vperm.slane %v1034, 1
      %v1040 = vmul.f32 %v1031, %v1036
      %v1041 = vmul.f32 %v1029, %v1037
      %v1042 = vmul.f32 %v1032, %v1036
      %v1043 = vmul.f32 %v1030, %v1037
      %v1044 = vadd.f32 %v1016, %v1040
      %v1045 = vadd.f32 %v1017, %v1041
      %v1046 = vadd.f32 %v1018, %v1042
      %v1047 = vadd.f32 %v1019, %v1043
      %1048 = vrot.lane.b32.xlu0 %v880, 1
      %v1049 = vpop.permute.xlu0 %1048
      %1050 = vrot.lane.b32.xlu0 %v882, 1
      %v1051 = vpop.permute.xlu0 %1050
      %1052 = vrot.lane.b32.xlu0 %v934, 1
      %v1053 = vpop.permute.xlu0 %1052
      %1054 = vrot.lane.b32.xlu0 %v936, 1
      %v1055 = vpop.permute.xlu0 %1054
      %vm1056 = vcmp.lt.s32.totalorder %v972, 1
      %v1057 = vsel %vm1056, %v1049, %v1053
      %v1058 = vsel %vm1056, %v1051, %v1055
      %v1059 = vsel %vm1056, %v1053, %v1049
      %v1060 = vsel %vm1056, %v1055, %v1051
      %s1061 = scalar_lea.vmem %s11, 6
      %v1062 = vld [vmem:[%s1061] sm:$0x3]
      %v1064 = vperm.slane %v1062, 0
      %v1065 = vperm.slane %v1062, 1
      %v1068 = vmul.f32 %v1059, %v1064
      %v1069 = vmul.f32 %v1057, %v1065
      %v1070 = vmul.f32 %v1060, %v1064
      %v1071 = vmul.f32 %v1058, %v1065
      %v1072 = vadd.f32 %v1044, %v1068
      %v1073 = vadd.f32 %v1045, %v1069
      %v1074 = vadd.f32 %v1046, %v1070
      %v1075 = vadd.f32 %v1047, %v1071
      %1076 = vrot.lane.b32.xlu0 %v890, 127
      %v1077 = vpop.permute.xlu0 %1076
      %1078 = vrot.lane.b32.xlu0 %v892, 127
      %v1079 = vpop.permute.xlu0 %1078
      %1080 = vrot.lane.b32.xlu0 %v944, 127
      %v1081 = vpop.permute.xlu0 %1080
      %1082 = vrot.lane.b32.xlu0 %v946, 127
      %v1083 = vpop.permute.xlu0 %1082
      %vm1084 = vcmp.lt.s32.totalorder %v972, 127
      %v1085 = vsel %vm1084, %v1077, %v1081
      %v1086 = vsel %vm1084, %v1079, %v1083
      %v1087 = vsel %vm1084, %v1081, %v1077
      %v1088 = vsel %vm1084, %v1083, %v1079
      %s1089 = scalar_lea.vmem %s11, 10
      %v1090 = vld [vmem:[%s1089] sm:$0x3]
      %v1092 = vperm.slane %v1090, 0
      %v1093 = vperm.slane %v1090, 1
      %v1096 = vmul.f32 %v1085, %v1092
      %v1097 = vmul.f32 %v1087, %v1093
      %v1098 = vmul.f32 %v1086, %v1092
      %v1099 = vmul.f32 %v1088, %v1093
      %v1100 = vadd.f32 %v1072, %v1096
      %v1101 = vadd.f32 %v1073, %v1097
      %v1102 = vadd.f32 %v1074, %v1098
      %v1103 = vadd.f32 %v1075, %v1099
      %1104 = vrot.lane.b32.xlu0 %v895, 113
      %v1105 = vpop.permute.xlu0 %1104
      %1106 = vrot.lane.b32.xlu0 %v897, 113
      %v1107 = vpop.permute.xlu0 %1106
      %1108 = vrot.lane.b32.xlu0 %v949, 113
      %v1109 = vpop.permute.xlu0 %1108
      %1110 = vrot.lane.b32.xlu0 %v951, 113
      %v1111 = vpop.permute.xlu0 %1110
      %vm1112 = vcmp.lt.s32.totalorder %v972, 113
      %v1113 = vsel %vm1112, %v1105, %v1109
      %v1114 = vsel %vm1112, %v1107, %v1111
      %v1115 = vsel %vm1112, %v1109, %v1105
      %v1116 = vsel %vm1112, %v1111, %v1107
      %s1117 = scalar_lea.vmem %s11, 12
      %v1118 = vld [vmem:[%s1117] sm:$0x3]
      %v1120 = vperm.slane %v1118, 0
      %v1121 = vperm.slane %v1118, 1
      %v1124 = vmul.f32 %v1113, %v1120
      %v1125 = vmul.f32 %v1115, %v1121
      %v1126 = vmul.f32 %v1114, %v1120
      %v1127 = vmul.f32 %v1116, %v1121
      %v1128 = vadd.f32 %v1100, %v1124
      %v1129 = vadd.f32 %v1101, %v1125
      %v1130 = vadd.f32 %v1102, %v1126
      %v1131 = vadd.f32 %v1103, %v1127
      %1132 = vrot.lane.b32.xlu0 %v900, 112
      %v1133 = vpop.permute.xlu0 %1132
      %1134 = vrot.lane.b32.xlu0 %v902, 112
      %v1135 = vpop.permute.xlu0 %1134
      %1136 = vrot.lane.b32.xlu0 %v954, 112
      %v1137 = vpop.permute.xlu0 %1136
      %1138 = vrot.lane.b32.xlu0 %v956, 112
      %v1139 = vpop.permute.xlu0 %1138
      %vm1140 = vcmp.lt.s32.totalorder %v972, 112
      %v1141 = vsel %vm1140, %v1133, %v1137
      %v1142 = vsel %vm1140, %v1135, %v1139
      %v1143 = vsel %vm1140, %v1137, %v1133
      %v1144 = vsel %vm1140, %v1139, %v1135
      %s1145 = scalar_lea.vmem %s11, 14
      %v1146 = vld [vmem:[%s1145] sm:$0x3]
      %v1148 = vperm.slane %v1146, 0
      %v1149 = vperm.slane %v1146, 1
      %v1152 = vmul.f32 %v1141, %v1148
      %v1153 = vmul.f32 %v1143, %v1149
      %v1154 = vmul.f32 %v1142, %v1148
      %v1155 = vmul.f32 %v1144, %v1149
      %v1156 = vadd.f32 %v1128, %v1152
      %v1157 = vadd.f32 %v1129, %v1153
      %v1158 = vadd.f32 %v1130, %v1154
      %v1159 = vadd.f32 %v1131, %v1155
      %1160 = vrot.lane.b32.xlu0 %v905, 111
      %v1161 = vpop.permute.xlu0 %1160
      %1162 = vrot.lane.b32.xlu0 %v907, 111
      %v1163 = vpop.permute.xlu0 %1162
      %1164 = vrot.lane.b32.xlu0 %v959, 111
      %v1165 = vpop.permute.xlu0 %1164
      %1166 = vrot.lane.b32.xlu0 %v961, 111
      %v1167 = vpop.permute.xlu0 %1166
      %vm1168 = vcmp.lt.s32.totalorder %v972, 111
      %v1169 = vsel %vm1168, %v1161, %v1165
      %v1170 = vsel %vm1168, %v1163, %v1167
      %v1171 = vsel %vm1168, %v1165, %v1161
      %v1172 = vsel %vm1168, %v1167, %v1163
      %s1173 = scalar_lea.vmem %s11, 16
      %v1174 = vld [vmem:[%s1173] sm:$0x3]
      %v1176 = vperm.slane %v1174, 0
      %v1177 = vperm.slane %v1174, 1
      %v1180 = vmul.f32 %v1169, %v1176
      %v1181 = vmul.f32 %v1171, %v1177
      %v1182 = vmul.f32 %v1170, %v1176
      %v1183 = vmul.f32 %v1172, %v1177
      %v1184 = vadd.f32 %v1156, %v1180
      %v1185 = vadd.f32 %v1157, %v1181
      %v1186 = vadd.f32 %v1158, %v1182
      %v1187 = vadd.f32 %v1159, %v1183
      %v1188 = vld [vmem:[%s8] sm:$0xff]
      %v1189 = vld [vmem:[%s8 + $0x8] sm:$0xff]
      %1191 = vset.pattern.permute.xlu0 0
      %1192 = vperm.xlu0 %1191, %v1188
      %v1193 = vpop.permute.xlu0 %1192
      %1196 = vset.pattern.permute.xlu0 0
      %1197 = vperm.xlu0 %1196, %v1189
      %v1198 = vpop.permute.xlu0 %1197
      %v1200 = vadd.f32 %v1184, %v1193
      %v1201 = vadd.f32 %v1185, %v1193
      %v1202 = vadd.f32 %v1186, %v1198
      %v1203 = vadd.f32 %v1187, %v1198
      %v1204 = vmax.f32 %v1200, 0.0
      %v1205 = vmax.f32 %v1201, 0.0
      %v1206 = vmax.f32 %v1202, 0.0
      %v1207 = vmax.f32 %v1203, 0.0
      %v1208 = vmin.f32 %v1204, 6.0
      %v1209 = vmin.f32 %v1205, 6.0
      %v1210 = vmin.f32 %v1206, 6.0
      %v1211 = vmin.f32 %v1207, 6.0
      %v1212 = vld [vmem:[%s9] sm:$0xf]
      %v1213 = vld [vmem:[%s9 + $0x4] sm:$0xf]
      %v1214 = vpack.c.bf16 %v1210, %v1208
      %v1215 = vpack.c.bf16 %v1211, %v1209
      %v1216 = vld [vmem:[%s10] sm:$0xff]
      %v1217 = vld [vmem:[%s10 + $0x8] sm:$0xff]
      %1219 = vset.pattern.permute.xlu0 0
      %1220 = vperm.xlu0 %1219, %v1216
      %v1221 = vpop.permute.xlu0 %1220
      %1224 = vset.pattern.permute.xlu0 0
      %1225 = vperm.xlu0 %1224, %v1217
      %v1226 = vpop.permute.xlu0 %1225
      %v1230 = vunpack.c.l.b16 %v1212
      %v1231 = vunpack.c.l.b16 %v1213
      %v1232 = vpack.c.b16 %v1231, %v1230
      %v1234 = vsel %vm605, %v1232, 0
      %1236 = vmatpush.bf16.msra.mxu0 0
      %1237 = vmatpush.bf16.msra.mxu0 0
      %1238 = vmatpush.bf16.msra.mxu0 0
      %1239 = vmatpush.bf16.msra.mxu0 0
      %1240 = vmatpush.bf16.msra.mxu0 0
      %1241 = vmatpush.bf16.msra.mxu0 0
      %1242 = vmatpush.bf16.msra.mxu0 0
      %1243 = vmatpush.bf16.msra.mxu0 %v1214
      %1244 = vmatmul.bf16.gmra.mxu0 %v1234
      %v1245 = vpop.f32.mrf.mxu0
      %v1246 = vadd.f32 %v1221, %v1245
      %v1247 = vpop.f32.mrf.mxu0
      %v1248 = vadd.f32 %v1226, %v1247
      %1249 = vdwg.mxu0
      %1250 = vmatpush.bf16.msra.mxu0 0
      %1251 = vmatpush.bf16.msra.mxu0 0
      %1252 = vmatpush.bf16.msra.mxu0 0
      %1253 = vmatpush.bf16.msra.mxu0 0
      %1254 = vmatpush.bf16.msra.mxu0 0
      %1255 = vmatpush.bf16.msra.mxu0 0
      %1256 = vmatpush.bf16.msra.mxu0 0
      %1257 = vmatpush.bf16.msra.mxu0 %v1215
      %1258 = vmatmul.bf16.gmra.mxu0 %v1234
      %v1259 = vpop.f32.mrf.mxu0
      %v1260 = vadd.f32 %v1221, %v1259
      %v1261 = vpop.f32.mrf.mxu0
      %v1262 = vadd.f32 %v1226, %v1261
      %1263 = vdwg.mxu0
      %v1264 = vpack.c.bf16 %v1260, %v1246
      %v1265 = vpack.c.bf16 %v1262, %v1248
      %1266 = vst [vmem:[%s420] sm:$0xff] %v1264
      %1267 = vst [vmem:[%s420 + $0x8] sm:$0xff] %v1265
      %s1268 = smul.u32 2, %s23
      %p1269 = scmp.lt.s32.totalorder %s1268, 3
      %s1270 = scalar_select %p1269, %s1268, 3
      %s1271 = smul.addr %s1270, 2
      %s1272 = smul.addr %s1271, 4
      %s1273 = scalar_lea.vmem %s12, %s1272
      // Predicated region
      $region69: #{_forward_impl.1} parent=67 // pred_check
        %p1274 = pneg %p298
      $region70: #{_forward_impl.1} parent=67 // pred_check_branch
        %1276 = sbr.rel (%p1274) target = $region72
      $region71: #{_forward_impl.1} parent=67 // pred_region
        %s1277 = smul.u32 2, %s23
      $region72: #{_forward_impl.1} parent=67 // pred_fallthru
        _
    $region68: #{_forward_impl.1} parent=5 // pred_fallthru
      _
    %p1278 = scmp.le.s32.totalorder 2, %s18
    // Predicated region
    $region73: #{_forward_impl.1} parent=5 // pred_check
      %p1279 = pneg %p1278
    $region74: #{_forward_impl.1} parent=5 // pred_check_branch
      %1281 = sbr.rel (%p1279) target = $region76
    $region75: #{_forward_impl.1} parent=5 // pred_region
      %s1282 = ssub.s32 %s18, 2
      // Predicated region
      $region77: #{_forward_impl.1} parent=75 // pred_check
        %p1283 = pneg %p304
      $region78: #{_forward_impl.1} parent=75 // pred_check_branch
        %1285 = sbr.rel (%p1283) target = $region80
      $region79: #{_forward_impl.1} parent=75 // pred_region
        %s1286 = smul.u32 2, %s24
        %p1287 = scmp.lt.s32.totalorder %s1286, 3
        %s1288 = scalar_select %p1287, %s1286, 3
        %s1289 = smul.addr %s1288, 2
        %s1290 = smul.addr %s1289, 4
        %s1291 = scalar_lea.vmem %s12, %s1290
      $region80: #{_forward_impl.1} parent=75 // pred_fallthru
        _
    $region76: #{_forward_impl.1} parent=5 // pred_fallthru
      _
  $region6: #{_forward_impl.1} parent=0 // loop_footer
    %s22 = sadd.s32 1, %s18
  $region7: #{_forward_impl.1} parent=0 // loop_footer_branch
    %17 = sbr.rel target = $region3
  $region8: #{_forward_impl.1} parent=0 // loop_exit
    _

</llo_original>
